<compile_context>
chip_gen: v5e
topology: v5e:2x2
jax: 0.10.0
libtpu: 0.0.40
codegen_flags: <defaults>
</compile_context>

<pallas_src>
import functools

import jax
import jax.numpy as jnp
from jax.experimental import pallas as pl
from jax.experimental.pallas import tpu as pltpu

CP = 16  # coord contraction dim padded to one bf16 sublane tile


# --------------------------------- sizing helpers ------------------------------------
def _round_up(x, m):
    return ((x + m - 1) // m) * m


def _vmem_limit_bytes():
    """Per-chip scoped-VMEM budget (v5e/v6e: 128 MiB phys, v7x: 64 MiB phys)."""
    cap = 64 * 1024 * 1024  # conservative fallback (safe on every generation)
    try:
        info = pltpu.get_tpu_info()
        cap = int(getattr(info, "vmem_capacity_bytes", cap))
    except Exception:
        pass
    return max(16 * 1024 * 1024, min(cap * 3 // 4, 96 * 1024 * 1024))


def _pick_tile(n, row_bytes, vmem_limit, cap=512):
    """Largest multiple-of-16 tile whose per-row footprint fits half the VMEM window."""
    budget = vmem_limit // 2
    t = budget // max(row_bytes, 1)
    t = max(16, min(cap, (t // 16) * 16))
    return min(t, _round_up(n, 16))


def _ensure_two_steps(t, n, b):
    """Keep >= 2 grid steps when possible so both v7x TensorCores get work."""
    while t > 16 and b * (_round_up(n, t) // t) < 2:
        t -= 16
    return t


def _pad_axis(a, axis, target):
    pad = target - a.shape[axis]
    if pad == 0:
        return a
    cfg = [(0, 0)] * a.ndim
    cfg[axis] = (0, pad)
    return jnp.pad(a, cfg)


def _full_spec(a):
    n = a.ndim
    return pl.BlockSpec(a.shape, lambda i, j, n=n: (0,) * n)


# --------------------- TransitionDown: per-point MLP (hoisted) ------------------------
def _td_kernel(x_ref, w_ref, b_ref, o_ref):
    # x_ref: (1, tn, Cin) bf16 -> o_ref: (1, tn, Cout) bf16 (halves gather/DMA bytes)
    h = jnp.dot(x_ref[0], w_ref[...], preferred_element_type=jnp.float32) + b_ref[...]
    o_ref[0] = jnp.maximum(h, 0.0).astype(o_ref.dtype)  # eval-BN folded into w/b; ReLU


def td_pointwise(x_bf, w, b, *, tn, vmem_limit):
    B, Np, Cin = x_bf.shape
    Cout = w.shape[1]
    return pl.pallas_call(
        _td_kernel,
        out_shape=jax.ShapeDtypeStruct((B, Np, Cout), jnp.bfloat16),
        grid=(B, Np // tn),
        in_specs=[pl.BlockSpec((1, tn, Cin), lambda i, j: (i, j, 0)),
                  _full_spec(w), _full_spec(b)],
        out_specs=pl.BlockSpec((1, tn, Cout), lambda i, j: (i, j, 0)),
        compiler_params=pltpu.CompilerParams(
            dimension_semantics=("parallel", "parallel"),
            vmem_limit_bytes=vmem_limit),
    )(x_bf, w, b)


# ---------------- fused local max-pool + per-point PT projections ---------------------
def _pool_proj_kernel(gz_ref, p2_ref, w1_ref, b1_ref, wpa_ref, bpa_ref,
                      wd1_ref, bd1_ref, x2_ref, cen_ref, gat_ref, *, mid):
    f32, bf = jnp.float32, jnp.bfloat16
    # local max-pool over the k TD neighbours (TD MLP already applied per point)
    zb = jnp.max(gz_ref[0], axis=0)                                   # (tm, Cout) bf16
    x2_ref[0] = zb.astype(f32)
    # linear1 then fused [phi | psi | alpha] projection (single MXU call)
    f = jnp.dot(zb, w1_ref[...], preferred_element_type=f32) + b1_ref[...]
    pa = jnp.dot(f.astype(bf), wpa_ref[...], preferred_element_type=f32) + bpa_ref[...]
    # position-encoding layer 1 hoisted via linearity: u = p @ wd1 (bd1 only on centre copy)
    u = jnp.dot(p2_ref[0], wd1_ref[...], preferred_element_type=f32)  # (tm, mid)
    cen_ref[0] = jnp.concatenate([pa[:, :mid], u + bd1_ref[...]], axis=-1)           # f32
    gat_ref[0] = jnp.concatenate([pa[:, mid:], u], axis=-1).astype(bf)                # bf16


def pool_proj(gz, p2c, q, *, tm, vmem_limit):
    B, k, Mp, Cout = gz.shape
    mid = q["w1"].shape[1]
    cp = p2c.shape[-1]
    weights = (q["w1"], q["b1"], q["wpa"], q["bpa"], q["wd1"], q["bd1"])
    return pl.pallas_call(
        functools.partial(_pool_proj_kernel, mid=mid),
        out_shape=(jax.ShapeDtypeStruct((B, Mp, Cout), jnp.float32),
                   jax.ShapeDtypeStruct((B, Mp, 2 * mid), jnp.float32),
                   jax.ShapeDtypeStruct((B, Mp, 3 * mid), jnp.bfloat16)),
        grid=(B, Mp // tm),
        in_specs=[pl.BlockSpec((1, k, tm, Cout), lambda i, j: (i, 0, j, 0)),
                  pl.BlockSpec((1, tm, cp), lambda i, j: (i, j, 0))]
                 + [_full_spec(w) for w in weights],
        out_specs=(pl.BlockSpec((1, tm, Cout), lambda i, j: (i, j, 0)),
                   pl.BlockSpec((1, tm, 2 * mid), lambda i, j: (i, j, 0)),
                   pl.BlockSpec((1, tm, 3 * mid), lambda i, j: (i, j, 0))),
        compiler_params=pltpu.CompilerParams(
            dimension_semantics=("parallel", "parallel"),
            vmem_limit_bytes=vmem_limit),
    )(gz, p2c, *weights)


# ---------------- PointTransformerBlock: vector attention over neighbours -------------
def _pt_attn_kernel(x2_ref, cen_ref, gat_ref,
                    wd2_ref, bd2_ref, wg1_ref, bg1_ref, wg2_ref, bg2_ref,
                    w2_ref, b2_ref, o_ref, *, k, tm, mid):
    f32, bf = jnp.float32, jnp.bfloat16
    c = cen_ref[0]                           # (tm, 2*mid) f32: [phi | u_i + bd1]
    phi_b = c[:, :mid].astype(bf)
    ub_b = c[:, mid:].astype(bf)
    g = gat_ref[0]                           # (k, tm, 3*mid) bf16: [psi | alpha | u_j]
    psi = g[:, :, :mid]
    alpha = g[:, :, mid:2 * mid]
    uj = g[:, :, 2 * mid:]

    # delta MLP: layer 1 is a plain subtract (linearity hoist), layer 2 a batched matmul
    d1 = jnp.maximum(ub_b[None] - uj, 0).reshape(k * tm, mid)
    delta = jnp.dot(d1, wd2_ref[...], preferred_element_type=f32) + bd2_ref[...]

    # gamma MLP on phi_i - psi_j + delta_ij, batched over all k*tm pairs
    t = (phi_b[None] - psi).reshape(k * tm, mid) + delta.astype(bf)
    gm = jnp.dot(t, wg1_ref[...], preferred_element_type=f32) + bg1_ref[...]
    gm = jnp.maximum(gm, 0.0).astype(bf)
    gm = jnp.dot(gm, wg2_ref[...], preferred_element_type=f32) + bg2_ref[...]
    g3 = gm.reshape(k, tm, mid)

    # channel-wise softmax over the k neighbours + aggregation of (alpha_j + delta_ij)
    v3 = alpha.astype(f32) + delta.reshape(k, tm, mid)
    mmax = jnp.max(g3, axis=0)
    e = jnp.exp(g3 - mmax[None])
    y = jnp.sum(e * v3, axis=0) * pl.reciprocal(jnp.sum(e, axis=0), approx=True)

    out = (jnp.dot(y.astype(bf), w2_ref[...], preferred_element_type=f32)
           + b2_ref[...] + x2_ref[0])        # linear2 + residual
    # TODO(synk): torchpcp may add BN/ReLU around linear1/linear2; paper semantics used here.
    o_ref[0] = out.astype(o_ref.dtype)


def pt_attention(x2, cen, gat_g, q, *, tm, vmem_limit):
    B, k, Mp, _ = gat_g.shape
    Cout = x2.shape[-1]
    mid = cen.shape[-1] // 2
    weights = (q["wd2"], q["bd2"], q["wg1"], q["bg1"],
               q["wg2"], q["bg2"], q["w2"], q["b2"])
    return pl.pallas_call(
        functools.partial(_pt_attn_kernel, k=k, tm=tm, mid=mid),
        out_shape=jax.ShapeDtypeStruct((B, Mp, Cout), jnp.float32),
        grid=(B, Mp // tm),
        in_specs=[pl.BlockSpec((1, tm, Cout), lambda i, j: (i, j, 0)),
                  pl.BlockSpec((1, tm, 2 * mid), lambda i, j: (i, j, 0)),
                  pl.BlockSpec((1, k, tm, 3 * mid), lambda i, j: (i, 0, j, 0))]
                 + [_full_spec(w) for w in weights],
        out_specs=pl.BlockSpec((1, tm, Cout), lambda i, j: (i, j, 0)),
        compiler_params=pltpu.CompilerParams(
            dimension_semantics=("parallel", "parallel"),
            vmem_limit_bytes=vmem_limit),
    )(x2, cen, gat_g, *weights)


# --------------------------------- JAX glue (indices) ---------------------------------
def farthest_point_sampling(points, num_sampling):
    # points: (N, coord). Deterministic start at index 0.
    # TODO(synk): torchpcp's CUDA FPS / kNN may break ties differently.
    d0 = jnp.sum((points - points[0]) ** 2, axis=-1)
    idxs = jnp.zeros((num_sampling,), jnp.int32)

    def body(i, state):
        idxs, dists = state
        nxt = jnp.argmax(dists).astype(jnp.int32)
        idxs = idxs.at[i].set(nxt)
        dists = jnp.minimum(dists, jnp.sum((points - points[nxt]) ** 2, axis=-1))
        return idxs, dists

    idxs, _ = jax.lax.fori_loop(1, num_sampling, body, (idxs, d0))
    return idxs


def knn_indices(query, ref, k):
    d = jnp.sum((query[:, None, :] - ref[None, :, :]) ** 2, axis=-1)
    _, idx = jax.lax.top_k(-d, k)
    return idx


# ------------------------------- parameter preparation --------------------------------
def prepare_params(p, coord):
    """Fold eval-BN, fuse phi/psi/alpha, pad the coord contraction to 16, cast to bf16."""
    bf, f32 = jnp.bfloat16, jnp.float32
    q = {}
    # TODO(synk): assumes running_mean = 0 (as in init_params); fold real running stats
    # into td_shift for actual checkpoints.
    s, t = p["td_scale"], p["td_shift"]
    q["td_w"] = (p["td_w"] * s).astype(bf)
    q["td_b"] = (p["td_b"] * s + t).astype(f32)
    q["w1"] = p["w1"].astype(bf)
    q["b1"] = p["b1"].astype(f32)
    q["wpa"] = jnp.concatenate([p["wphi"], p["wpsi"], p["walpha"]], axis=1).astype(bf)
    q["bpa"] = jnp.concatenate([p["bphi"], p["bpsi"], p["balpha"]], axis=1).astype(f32)
    q["wd1"] = jnp.pad(p["wd1"], ((0, CP - coord), (0, 0))).astype(bf)
    q["bd1"] = p["bd1"].astype(f32)
    q["wd2"] = p["wd2"].astype(bf)
    q["bd2"] = p["bd2"].astype(f32)
    q["wg1"] = p["wg1"].astype(bf)
    q["bg1"] = p["bg1"].astype(f32)
    q["wg2"] = p["wg2"].astype(bf)
    q["bg2"] = p["bg2"].astype(f32)
    q["w2"] = p["w2"].astype(bf)
    q["b2"] = p["b2"].astype(f32)
    return q


# ------------------------------------- forward ----------------------------------------
def tdpt_forward(x_ncw, p1_ncw, params, *, td_k, num_sampling, pt_k):
    x = jnp.transpose(x_ncw, (0, 2, 1)).astype(jnp.float32)     # (B, N, Cin)
    p1 = jnp.transpose(p1_ncw, (0, 2, 1)).astype(jnp.float32)   # (B, N, coord)
    B, N, Cin = x.shape
    coord = p1.shape[-1]
    q = prepare_params(params, coord)
    Cout = q["td_w"].shape[1]
    mid = q["w1"].shape[1]
    M = num_sampling
    vmem_limit = _vmem_limit_bytes()

    # ---- TransitionDown MLP hoisted to per-point over all N points ----
    rb_td = 4 * Cin + 8 * Cout
    tn = _ensure_two_steps(_pick_tile(N, rb_td, vmem_limit, cap=512), N, B)
    Np = _round_up(N, tn)
    z = td_pointwise(_pad_axis(x, 1, Np).astype(jnp.bfloat16), q["td_w"], q["td_b"],
                     tn=tn, vmem_limit=vmem_limit)               # (B, Np, Cout) bf16

    # ---- sampling + neighbourhoods (plain-JAX index glue) ----
    gather = jax.vmap(lambda a, i: a[i])
    fps_idx = jax.vmap(lambda pts: farthest_point_sampling(pts, M))(p1)      # (B, M)
    p2 = gather(p1, fps_idx)                                                 # (B, M, coord)
    knn_td = jax.vmap(lambda qr, r: knn_indices(qr, r, td_k))(p2, p1)        # (B, M, td_k)
    knn_pt = jax.vmap(lambda qr, r: knn_indices(qr, r, pt_k))(p2, p2)        # (B, M, pt_k)

    # ---- one shared point tile for pool/proj + attention (VMEM-derived, mult of 16) ----
    rb_attn = (2 * pt_k * 3 * mid * 2 + 2 * (2 * mid * 4 + Cout * 4)
               + 2 * Cout * 4 + 24 * pt_k * mid)
    rb_proj = (2 * td_k * Cout * 2 + 2 * CP * 2
               + 2 * (Cout * 4 + 2 * mid * 4 + 3 * mid * 2) + 8 * mid)
    tm = _ensure_two_steps(_pick_tile(M, max(rb_attn, rb_proj), vmem_limit, cap=256), M, B)
    Mp = _round_up(M, tm)

    p2p = _pad_axis(p2, 1, Mp)
    knn_td_p = _pad_axis(knn_td, 1, Mp)      # padded rows gather row 0; sliced off at the end
    knn_pt_p = _pad_axis(knn_pt, 1, Mp)

    # gathers land directly in the kernel-friendly (B, k, M, C) layout: the tiny index
    # arrays are transposed instead of the gathered tensors (no big HBM transpose pass).
    gz = gather(z, jnp.swapaxes(knn_td_p, 1, 2))                 # (B, td_k, Mp, Cout) bf16
    p2c = _pad_axis(p2p, 2, CP).astype(jnp.bfloat16)             # (B, Mp, CP)

    x2, cen, gat = pool_proj(gz, p2c, q, tm=tm, vmem_limit=vmem_limit)

    gat_g = gather(gat, jnp.swapaxes(knn_pt_p, 1, 2))            # (B, pt_k, Mp, 3*mid) bf16
    y = pt_attention(x2, cen, gat_g, q, tm=tm, vmem_limit=vmem_limit)        # (B, Mp, Cout)
    y = y[:, :M]

    # back to PyTorch NCW convention
    return jnp.transpose(y, (0, 2, 1)), jnp.transpose(p2, (0, 2, 1))


# --------------------------------- parameter init -------------------------------------
def init_params(key, cin, cout, mid, coord):
    names_shapes = [
        ("td_w", (cin, cout)), ("td_b", (1, cout)),
        ("td_gamma", (1, cout)), ("td_beta", (1, cout)),
        ("w1", (cout, mid)), ("b1", (1, mid)),
        ("wphi", (mid, mid)), ("bphi", (1, mid)),
        ("wpsi", (mid, mid)), ("bpsi", (1, mid)),
        ("walpha", (mid, mid)), ("balpha", (1, mid)),
        ("wd1", (coord, mid)), ("bd1", (1, mid)),
        ("wd2", (mid, mid)), ("bd2", (1, mid)),
        ("wg1", (mid, mid)), ("bg1", (1, mid)),
        ("wg2", (mid, mid)), ("bg2", (1, mid)),
        ("w2", (mid, cout)), ("b2", (1, cout)),
    ]
    keys = jax.random.split(key, len(names_shapes))
    p = {n: (0.2 * jax.random.normal(k, s)).astype(jnp.float32)
         for (n, s), k in zip(names_shapes, keys)}
    # eval-mode BatchNorm fold (running_mean=0, running_var=1, eps=1e-5)
    gamma = 1.0 + p.pop("td_gamma")
    beta = p.pop("td_beta")
    p["td_scale"] = (gamma / jnp.sqrt(1.0 + 1e-5)).astype(jnp.float32)
    p["td_shift"] = beta
    return p


if __name__ == "__main__":
    B, N = 2, 16
    IN_C, OUT_C, MID_C, COORD = 8, 16, 16, 3
    TD_K, NUM_SAMPLING, PT_K = 4, 8, 4

    key = jax.random.PRNGKey(0)
    kx, kp, kw = jax.random.split(key, 3)
    x = jax.random.normal(kx, (B, IN_C, N), dtype=jnp.float32)     # NCW, like PyTorch Conv1d
    p1 = jax.random.normal(kp, (B, COORD, N), dtype=jnp.float32)   # (B, 3, N) coordinates
    params = init_params(kw, IN_C, OUT_C, MID_C, COORD)

    fwd = jax.jit(functools.partial(tdpt_forward, td_k=TD_K,
                                    num_sampling=NUM_SAMPLING, pt_k=PT_K))
    y, p2 = fwd(x, p1, params)
    jax.block_until_ready((y, p2))
    assert y.shape == (B, OUT_C, NUM_SAMPLING), y.shape
    assert p2.shape == (B, COORD, NUM_SAMPLING), p2.shape
    assert bool(jnp.all(jnp.isfinite(y))) and bool(jnp.all(jnp.isfinite(p2)))
    print("KERNEL_OK")
</pallas_src>

<mosaic_0001>
module attributes {stable_mosaic.version = 11 : i64} {
  func.func @_td_kernel(%arg0: i32, %arg1: i32, %arg2: memref<1x16x8xbf16, #tpu.memory_space<vmem>>, %arg3: memref<8x16xbf16, #tpu.memory_space<vmem>>, %arg4: memref<1x16xf32, #tpu.memory_space<vmem>>, %arg5: memref<1x16x16xbf16, #tpu.memory_space<vmem>>) attributes {dimension_semantics = [#tpu.dimension_semantics<parallel>, #tpu.dimension_semantics<parallel>], iteration_bounds = array<i64: 2, 1>, scalar_prefetch = 0 : i64, scratch_operands = 0 : i64, tpu.core_type = #tpu.core_type<tc>, window_params = [{transform_indices = @transform_0, window_bounds = array<i64: 1, 16, 8>}, {pipeline_mode = #tpu.pipeline_mode<synchronous>, transform_indices = @transform_1, window_bounds = array<i64: 8, 16>}, {pipeline_mode = #tpu.pipeline_mode<synchronous>, transform_indices = @transform_2, window_bounds = array<i64: 1, 16>}, {transform_indices = @transform_3, window_bounds = array<i64: 1, 16, 16>}]} {
    %c0 = arith.constant 0 : index
    %c0_0 = arith.constant 0 : index
    %c0_1 = arith.constant 0 : index
    %0 = vector.load %arg2[%c0, %c0_0, %c0_1] : memref<1x16x8xbf16, #tpu.memory_space<vmem>>, vector<1x16x8xbf16>
    %1 = vector.shape_cast %0 : vector<1x16x8xbf16> to vector<16x8xbf16>
    %c0_2 = arith.constant 0 : index
    %c0_3 = arith.constant 0 : index
    %2 = vector.load %arg3[%c0_2, %c0_3] : memref<8x16xbf16, #tpu.memory_space<vmem>>, vector<8x16xbf16>
    %cst = arith.constant dense<0.000000e+00> : vector<16x16xf32>
    %3 = tpu.matmul %1, %2, %cst {dimension_numbers = #tpu.dot_dimension_numbers<[1], [0], [0], [1], [0, 0, 1, 1], [], []>} : vector<16x8xbf16>, vector<8x16xbf16>, vector<16x16xf32> -> vector<16x16xf32>
    %c0_4 = arith.constant 0 : index
    %c0_5 = arith.constant 0 : index
    %4 = vector.load %arg4[%c0_4, %c0_5] : memref<1x16xf32, #tpu.memory_space<vmem>>, vector<1x16xf32>
    %5 = vector.broadcast %4 : vector<1x16xf32> to vector<16x16xf32>
    %6 = arith.addf %3, %5 : vector<16x16xf32>
    %cst_6 = arith.constant 0.000000e+00 : f32
    %7 = vector.broadcast %cst_6 : f32 to vector<16x16xf32>
    %8 = arith.maximumf %6, %7 : vector<16x16xf32>
    %9 = arith.truncf %8 : vector<16x16xf32> to vector<16x16xbf16>
    %c0_7 = arith.constant 0 : index
    %c0_8 = arith.constant 0 : index
    %c0_9 = arith.constant 0 : index
    %10 = vector.load %arg5[%c0_7, %c0_8, %c0_9] : memref<1x16x16xbf16, #tpu.memory_space<vmem>>, vector<1x16x16xbf16>
    %11 = vector.shape_cast %10 : vector<1x16x16xbf16> to vector<16x16xbf16>
    %12 = vector.shape_cast %9 : vector<16x16xbf16> to vector<1x16x16xbf16>
    tpu.vector_store %arg5[%c0_7, %c0_8, %c0_9], %12 {strides = array<i32>} : memref<1x16x16xbf16, #tpu.memory_space<vmem>>, vector<1x16x16xbf16>,
    return
  }
  func.func @transform_0(%arg0: i32, %arg1: i32) -> (i32, i32, i32) {
    %c0_i32 = arith.constant 0 : i32
    %c0_i32_0 = arith.constant 0 : i32
    return %arg0, %arg1, %c0_i32 : i32, i32, i32
  }
  func.func @transform_1(%arg0: i32, %arg1: i32) -> (i32, i32) {
    %c0_i32 = arith.constant 0 : i32
    %c0_i32_0 = arith.constant 0 : i32
    %c0_i32_1 = arith.constant 0 : i32
    return %c0_i32, %c0_i32_0 : i32, i32
  }
  func.func @transform_2(%arg0: i32, %arg1: i32) -> (i32, i32) {
    %c0_i32 = arith.constant 0 : i32
    %c0_i32_0 = arith.constant 0 : i32
    %c0_i32_1 = arith.constant 0 : i32
    return %c0_i32, %c0_i32_0 : i32, i32
  }
  func.func @transform_3(%arg0: i32, %arg1: i32) -> (i32, i32, i32) {
    %c0_i32 = arith.constant 0 : i32
    %c0_i32_0 = arith.constant 0 : i32
    return %arg0, %arg1, %c0_i32 : i32, i32, i32
  }
}

module attributes {stable_mosaic.version = 11 : i64} {
  func.func @_pool_proj_kernel(%arg0: i32, %arg1: i32, %arg2: memref<1x4x16x16xbf16, #tpu.memory_space<vmem>>, %arg3: memref<1x16x16xbf16, #tpu.memory_space<vmem>>, %arg4: memref<16x16xbf16, #tpu.memory_space<vmem>>, %arg5: memref<1x16xf32, #tpu.memory_space<vmem>>, %arg6: memref<16x48xbf16, #tpu.memory_space<vmem>>, %arg7: memref<1x48xf32, #tpu.memory_space<vmem>>, %arg8: memref<16x16xbf16, #tpu.memory_space<vmem>>, %arg9: memref<1x16xf32, #tpu.memory_space<vmem>>, %arg10: memref<1x16x16xf32, #tpu.memory_space<vmem>>, %arg11: memref<1x16x32xf32, #tpu.memory_space<vmem>>, %arg12: memref<1x16x48xbf16, #tpu.memory_space<vmem>>) attributes {dimension_semantics = [#tpu.dimension_semantics<parallel>, #tpu.dimension_semantics<parallel>], iteration_bounds = array<i64: 2, 1>, scalar_prefetch = 0 : i64, scratch_operands = 0 : i64, tpu.core_type = #tpu.core_type<tc>, window_params = [{transform_indices = @transform_0, window_bounds = array<i64: 1, 4, 16, 16>}, {transform_indices = @transform_1, window_bounds = array<i64: 1, 16, 16>}, {pipeline_mode = #tpu.pipeline_mode<synchronous>, transform_indices = @transform_2, window_bounds = array<i64: 16, 16>}, {pipeline_mode = #tpu.pipeline_mode<synchronous>, transform_indices = @transform_3, window_bounds = array<i64: 1, 16>}, {pipeline_mode = #tpu.pipeline_mode<synchronous>, transform_indices = @transform_4, window_bounds = array<i64: 16, 48>}, {pipeline_mode = #tpu.pipeline_mode<synchronous>, transform_indices = @transform_5, window_bounds = array<i64: 1, 48>}, {pipeline_mode = #tpu.pipeline_mode<synchronous>, transform_indices = @transform_6, window_bounds = array<i64: 16, 16>}, {pipeline_mode = #tpu.pipeline_mode<synchronous>, transform_indices = @transform_7, window_bounds = array<i64: 1, 16>}, {transform_indices = @transform_8, window_bounds = array<i64: 1, 16, 16>}, {transform_indices = @transform_9, window_bounds = array<i64: 1, 16, 32>}, {transform_indices = @transform_10, window_bounds = array<i64: 1, 16, 48>}]} {
    %c0 = arith.constant 0 : index
    %c0_0 = arith.constant 0 : index
    %c0_1 = arith.constant 0 : index
    %c0_2 = arith.constant 0 : index
    %0 = vector.load %arg2[%c0, %c0_0, %c0_1, %c0_2] : memref<1x4x16x16xbf16, #tpu.memory_space<vmem>>, vector<1x4x16x16xbf16>
    %1 = vector.shape_cast %0 : vector<1x4x16x16xbf16> to vector<4x16x16xbf16>
    %cst = arith.constant dense<0xFF80> : vector<16x16xbf16>
    %2 = vector.multi_reduction <maximumf>, %1, %cst [0] : vector<4x16x16xbf16> to vector<16x16xbf16>
    %3 = arith.extf %2 : vector<16x16xbf16> to vector<16x16xf32>
    %c0_3 = arith.constant 0 : index
    %c0_4 = arith.constant 0 : index
    %c0_5 = arith.constant 0 : index
    %4 = vector.load %arg10[%c0_3, %c0_4, %c0_5] : memref<1x16x16xf32, #tpu.memory_space<vmem>>, vector<1x16x16xf32>
    %5 = vector.shape_cast %4 : vector<1x16x16xf32> to vector<16x16xf32>
    %6 = vector.shape_cast %3 : vector<16x16xf32> to vector<1x16x16xf32>
    tpu.vector_store %arg10[%c0_3, %c0_4, %c0_5], %6 {strides = array<i32>} : memref<1x16x16xf32, #tpu.memory_space<vmem>>, vector<1x16x16xf32>,
    %c0_6 = arith.constant 0 : index
    %c0_7 = arith.constant 0 : index
    %7 = vector.load %arg4[%c0_6, %c0_7] : memref<16x16xbf16, #tpu.memory_space<vmem>>, vector<16x16xbf16>
    %cst_8 = arith.constant dense<0.000000e+00> : vector<16x16xf32>
    %8 = tpu.matmul %2, %7, %cst_8 {dimension_numbers = #tpu.dot_dimension_numbers<[1], [0], [0], [1], [0, 0, 1, 1], [], []>} : vector<16x16xbf16>, vector<16x16xbf16>, vector<16x16xf32> -> vector<16x16xf32>
    %c0_9 = arith.constant 0 : index
    %c0_10 = arith.constant 0 : index
    %9 = vector.load %arg5[%c0_9, %c0_10] : memref<1x16xf32, #tpu.memory_space<vmem>>, vector<1x16xf32>
    %10 = vector.broadcast %9 : vector<1x16xf32> to vector<16x16xf32>
    %11 = arith.addf %8, %10 : vector<16x16xf32>
    %12 = arith.truncf %11 : vector<16x16xf32> to vector<16x16xbf16>
    %c0_11 = arith.constant 0 : index
    %c0_12 = arith.constant 0 : index
    %13 = vector.load %arg6[%c0_11, %c0_12] : memref<16x48xbf16, #tpu.memory_space<vmem>>, vector<16x48xbf16>
    %cst_13 = arith.constant dense<0.000000e+00> : vector<16x48xf32>
    %14 = tpu.matmul %12, %13, %cst_13 {dimension_numbers = #tpu.dot_dimension_numbers<[1], [0], [0], [1], [0, 0, 1, 1], [], []>} : vector<16x16xbf16>, vector<16x48xbf16>, vector<16x48xf32> -> vector<16x48xf32>
    %c0_14 = arith.constant 0 : index
    %c0_15 = arith.constant 0 : index
    %15 = vector.load %arg7[%c0_14, %c0_15] : memref<1x48xf32, #tpu.memory_space<vmem>>, vector<1x48xf32>
    %16 = vector.broadcast %15 : vector<1x48xf32> to vector<16x48xf32>
    %17 = arith.addf %14, %16 : vector<16x48xf32>
    %c0_16 = arith.constant 0 : index
    %c0_17 = arith.constant 0 : index
    %c0_18 = arith.constant 0 : index
    %18 = vector.load %arg3[%c0_16, %c0_17, %c0_18] : memref<1x16x16xbf16, #tpu.memory_space<vmem>>, vector<1x16x16xbf16>
    %19 = vector.shape_cast %18 : vector<1x16x16xbf16> to vector<16x16xbf16>
    %c0_19 = arith.constant 0 : index
    %c0_20 = arith.constant 0 : index
    %20 = vector.load %arg8[%c0_19, %c0_20] : memref<16x16xbf16, #tpu.memory_space<vmem>>, vector<16x16xbf16>
    %cst_21 = arith.constant dense<0.000000e+00> : vector<16x16xf32>
    %21 = tpu.matmul %19, %20, %cst_21 {dimension_numbers = #tpu.dot_dimension_numbers<[1], [0], [0], [1], [0, 0, 1, 1], [], []>} : vector<16x16xbf16>, vector<16x16xbf16>, vector<16x16xf32> -> vector<16x16xf32>
    %22 = vector.extract_strided_slice %17 {offsets = [0, 0], sizes = [16, 16], strides = [1, 1]} : vector<16x48xf32> to vector<16x16xf32>
    %c0_22 = arith.constant 0 : index
    %c0_23 = arith.constant 0 : index
    %23 = vector.load %arg9[%c0_22, %c0_23] : memref<1x16xf32, #tpu.memory_space<vmem>>, vector<1x16xf32>
    %24 = vector.broadcast %23 : vector<1x16xf32> to vector<16x16xf32>
    %25 = arith.addf %21, %24 : vector<16x16xf32>
    %26 = tpu.concatenate %22, %25 in 1 : vector<16x16xf32>, vector<16x16xf32> -> vector<16x32xf32>
    %c0_24 = arith.constant 0 : index
    %c0_25 = arith.constant 0 : index
    %c0_26 = arith.constant 0 : index
    %27 = vector.load %arg11[%c0_24, %c0_25, %c0_26] : memref<1x16x32xf32, #tpu.memory_space<vmem>>, vector<1x16x32xf32>
    %28 = vector.shape_cast %27 : vector<1x16x32xf32> to vector<16x32xf32>
    %29 = vector.shape_cast %26 : vector<16x32xf32> to vector<1x16x32xf32>
    tpu.vector_store %arg11[%c0_24, %c0_25, %c0_26], %29 {strides = array<i32>} : memref<1x16x32xf32, #tpu.memory_space<vmem>>, vector<1x16x32xf32>,
    %30 = vector.extract_strided_slice %17 {offsets = [0, 16], sizes = [16, 32], strides = [1, 1]} : vector<16x48xf32> to vector<16x32xf32>
    %31 = tpu.concatenate %30, %21 in 1 : vector<16x32xf32>, vector<16x16xf32> -> vector<16x48xf32>
    %32 = arith.truncf %31 : vector<16x48xf32> to vector<16x48xbf16>
    %c0_27 = arith.constant 0 : index
    %c0_28 = arith.constant 0 : index
    %c0_29 = arith.constant 0 : index
    %33 = vector.load %arg12[%c0_27, %c0_28, %c0_29] : memref<1x16x48xbf16, #tpu.memory_space<vmem>>, vector<1x16x48xbf16>
    %34 = vector.shape_cast %33 : vector<1x16x48xbf16> to vector<16x48xbf16>
    %35 = vector.shape_cast %32 : vector<16x48xbf16> to vector<1x16x48xbf16>
    tpu.vector_store %arg12[%c0_27, %c0_28, %c0_29], %35 {strides = array<i32>} : memref<1x16x48xbf16, #tpu.memory_space<vmem>>, vector<1x16x48xbf16>,
    return
  }
  func.func @transform_0(%arg0: i32, %arg1: i32) -> (i32, i32, i32, i32) {
    %c0_i32 = arith.constant 0 : i32
    %c0_i32_0 = arith.constant 0 : i32
    %c0_i32_1 = arith.constant 0 : i32
    return %arg0, %c0_i32, %arg1, %c0_i32_0 : i32, i32, i32, i32
  }
  func.func @transform_1(%arg0: i32, %arg1: i32) -> (i32, i32, i32) {
    %c0_i32 = arith.constant 0 : i32
    %c0_i32_0 = arith.constant 0 : i32
    return %arg0, %arg1, %c0_i32 : i32, i32, i32
  }
  func.func @transform_2(%arg0: i32, %arg1: i32) -> (i32, i32) {
    %c0_i32 = arith.constant 0 : i32
    %c0_i32_0 = arith.constant 0 : i32
    %c0_i32_1 = arith.constant 0 : i32
    return %c0_i32, %c0_i32_0 : i32, i32
  }
  func.func @transform_3(%arg0: i32, %arg1: i32) -> (i32, i32) {
    %c0_i32 = arith.constant 0 : i32
    %c0_i32_0 = arith.constant 0 : i32
    %c0_i32_1 = arith.constant 0 : i32
    return %c0_i32, %c0_i32_0 : i32, i32
  }
  func.func @transform_4(%arg0: i32, %arg1: i32) -> (i32, i32) {
    %c0_i32 = arith.constant 0 : i32
    %c0_i32_0 = arith.constant 0 : i32
    %c0_i32_1 = arith.constant 0 : i32
    return %c0_i32, %c0_i32_0 : i32, i32
  }
  func.func @transform_5(%arg0: i32, %arg1: i32) -> (i32, i32) {
    %c0_i32 = arith.constant 0 : i32
    %c0_i32_0 = arith.constant 0 : i32
    %c0_i32_1 = arith.constant 0 : i32
    return %c0_i32, %c0_i32_0 : i32, i32
  }
  func.func @transform_6(%arg0: i32, %arg1: i32) -> (i32, i32) {
    %c0_i32 = arith.constant 0 : i32
    %c0_i32_0 = arith.constant 0 : i32
    %c0_i32_1 = arith.constant 0 : i32
    return %c0_i32, %c0_i32_0 : i32, i32
  }
  func.func @transform_7(%arg0: i32, %arg1: i32) -> (i32, i32) {
    %c0_i32 = arith.constant 0 : i32
    %c0_i32_0 = arith.constant 0 : i32
    %c0_i32_1 = arith.constant 0 : i32
    return %c0_i32, %c0_i32_0 : i32, i32
  }
  func.func @transform_8(%arg0: i32, %arg1: i32) -> (i32, i32, i32) {
    %c0_i32 = arith.constant 0 : i32
    %c0_i32_0 = arith.constant 0 : i32
    return %arg0, %arg1, %c0_i32 : i32, i32, i32
  }
  func.func @transform_9(%arg0: i32, %arg1: i32) -> (i32, i32, i32) {
    %c0_i32 = arith.constant 0 : i32
    %c0_i32_0 = arith.constant 0 : i32
    return %arg0, %arg1, %c0_i32 : i32, i32, i32
  }
  func.func @transform_10(%arg0: i32, %arg1: i32) -> (i32, i32, i32) {
    %c0_i32 = arith.constant 0 : i32
    %c0_i32_0 = arith.constant 0 : i32
    return %arg0, %arg1, %c0_i32 : i32, i32, i32
  }
}

module attributes {stable_mosaic.version = 11 : i64} {
  func.func @_pt_attn_kernel(%arg0: i32, %arg1: i32, %arg2: memref<1x16x16xf32, #tpu.memory_space<vmem>>, %arg3: memref<1x16x32xf32, #tpu.memory_space<vmem>>, %arg4: memref<1x4x16x48xbf16, #tpu.memory_space<vmem>>, %arg5: memref<16x16xbf16, #tpu.memory_space<vmem>>, %arg6: memref<1x16xf32, #tpu.memory_space<vmem>>, %arg7: memref<16x16xbf16, #tpu.memory_space<vmem>>, %arg8: memref<1x16xf32, #tpu.memory_space<vmem>>, %arg9: memref<16x16xbf16, #tpu.memory_space<vmem>>, %arg10: memref<1x16xf32, #tpu.memory_space<vmem>>, %arg11: memref<16x16xbf16, #tpu.memory_space<vmem>>, %arg12: memref<1x16xf32, #tpu.memory_space<vmem>>, %arg13: memref<1x16x16xf32, #tpu.memory_space<vmem>>) attributes {dimension_semantics = [#tpu.dimension_semantics<parallel>, #tpu.dimension_semantics<parallel>], iteration_bounds = array<i64: 2, 1>, scalar_prefetch = 0 : i64, scratch_operands = 0 : i64, tpu.core_type = #tpu.core_type<tc>, window_params = [{transform_indices = @transform_0, window_bounds = array<i64: 1, 16, 16>}, {transform_indices = @transform_1, window_bounds = array<i64: 1, 16, 32>}, {transform_indices = @transform_2, window_bounds = array<i64: 1, 4, 16, 48>}, {pipeline_mode = #tpu.pipeline_mode<synchronous>, transform_indices = @transform_3, window_bounds = array<i64: 16, 16>}, {pipeline_mode = #tpu.pipeline_mode<synchronous>, transform_indices = @transform_4, window_bounds = array<i64: 1, 16>}, {pipeline_mode = #tpu.pipeline_mode<synchronous>, transform_indices = @transform_5, window_bounds = array<i64: 16, 16>}, {pipeline_mode = #tpu.pipeline_mode<synchronous>, transform_indices = @transform_6, window_bounds = array<i64: 1, 16>}, {pipeline_mode = #tpu.pipeline_mode<synchronous>, transform_indices = @transform_7, window_bounds = array<i64: 16, 16>}, {pipeline_mode = #tpu.pipeline_mode<synchronous>, transform_indices = @transform_8, window_bounds = array<i64: 1, 16>}, {pipeline_mode = #tpu.pipeline_mode<synchronous>, transform_indices = @transform_9, window_bounds = array<i64: 16, 16>}, {pipeline_mode = #tpu.pipeline_mode<synchronous>, transform_indices = @transform_10, window_bounds = array<i64: 1, 16>}, {transform_indices = @transform_11, window_bounds = array<i64: 1, 16, 16>}]} {
    %c0 = arith.constant 0 : index
    %c0_0 = arith.constant 0 : index
    %c0_1 = arith.constant 0 : index
    %0 = vector.load %arg3[%c0, %c0_0, %c0_1] : memref<1x16x32xf32, #tpu.memory_space<vmem>>, vector<1x16x32xf32>
    %1 = vector.shape_cast %0 : vector<1x16x32xf32> to vector<16x32xf32>
    %2 = vector.extract_strided_slice %1 {offsets = [0, 0], sizes = [16, 16], strides = [1, 1]} : vector<16x32xf32> to vector<16x16xf32>
    %3 = arith.truncf %2 : vector<16x16xf32> to vector<16x16xbf16>
    %4 = vector.extract_strided_slice %1 {offsets = [0, 16], sizes = [16, 16], strides = [1, 1]} : vector<16x32xf32> to vector<16x16xf32>
    %5 = arith.truncf %4 : vector<16x16xf32> to vector<16x16xbf16>
    %c0_2 = arith.constant 0 : index
    %c0_3 = arith.constant 0 : index
    %c0_4 = arith.constant 0 : index
    %c0_5 = arith.constant 0 : index
    %6 = vector.load %arg4[%c0_2, %c0_3, %c0_4, %c0_5] : memref<1x4x16x48xbf16, #tpu.memory_space<vmem>>, vector<1x4x16x48xbf16>
    %7 = vector.shape_cast %6 : vector<1x4x16x48xbf16> to vector<4x16x48xbf16>
    %8 = vector.extract_strided_slice %7 {offsets = [0, 0, 0], sizes = [4, 16, 16], strides = [1, 1, 1]} : vector<4x16x48xbf16> to vector<4x16x16xbf16>
    %9 = vector.extract_strided_slice %7 {offsets = [0, 0, 16], sizes = [4, 16, 16], strides = [1, 1, 1]} : vector<4x16x48xbf16> to vector<4x16x16xbf16>
    %10 = vector.extract_strided_slice %7 {offsets = [0, 0, 32], sizes = [4, 16, 16], strides = [1, 1, 1]} : vector<4x16x48xbf16> to vector<4x16x16xbf16>
    %11 = vector.shape_cast %5 : vector<16x16xbf16> to vector<1x16x16xbf16>
    %12 = vector.broadcast %11 : vector<1x16x16xbf16> to vector<4x16x16xbf16>
    %13 = arith.subf %12, %10 : vector<4x16x16xbf16>
    %cst = arith.constant 0.000000e+00 : bf16
    %14 = vector.broadcast %cst : bf16 to vector<4x16x16xbf16>
    %15 = arith.maximumf %13, %14 : vector<4x16x16xbf16>
    %16 = vector.shape_cast %15 : vector<4x16x16xbf16> to vector<64x16xbf16>
    %c0_6 = arith.constant 0 : index
    %c0_7 = arith.constant 0 : index
    %17 = vector.load %arg5[%c0_6, %c0_7] : memref<16x16xbf16, #tpu.memory_space<vmem>>, vector<16x16xbf16>
    %cst_8 = arith.constant dense<0.000000e+00> : vector<64x16xf32>
    %18 = tpu.matmul %16, %17, %cst_8 {dimension_numbers = #tpu.dot_dimension_numbers<[1], [0], [0], [1], [0, 0, 1, 1], [], []>} : vector<64x16xbf16>, vector<16x16xbf16>, vector<64x16xf32> -> vector<64x16xf32>
    %c0_9 = arith.constant 0 : index
    %c0_10 = arith.constant 0 : index
    %19 = vector.load %arg6[%c0_9, %c0_10] : memref<1x16xf32, #tpu.memory_space<vmem>>, vector<1x16xf32>
    %20 = vector.broadcast %19 : vector<1x16xf32> to vector<64x16xf32>
    %21 = arith.addf %18, %20 : vector<64x16xf32>
    %22 = vector.shape_cast %3 : vector<16x16xbf16> to vector<1x16x16xbf16>
    %23 = vector.broadcast %22 : vector<1x16x16xbf16> to vector<4x16x16xbf16>
    %24 = arith.subf %23, %8 : vector<4x16x16xbf16>
    %25 = vector.shape_cast %24 : vector<4x16x16xbf16> to vector<64x16xbf16>
    %26 = arith.truncf %21 : vector<64x16xf32> to vector<64x16xbf16>
    %27 = arith.addf %25, %26 : vector<64x16xbf16>
    %c0_11 = arith.constant 0 : index
    %c0_12 = arith.constant 0 : index
    %28 = vector.load %arg7[%c0_11, %c0_12] : memref<16x16xbf16, #tpu.memory_space<vmem>>, vector<16x16xbf16>
    %cst_13 = arith.constant dense<0.000000e+00> : vector<64x16xf32>
    %29 = tpu.matmul %27, %28, %cst_13 {dimension_numbers = #tpu.dot_dimension_numbers<[1], [0], [0], [1], [0, 0, 1, 1], [], []>} : vector<64x16xbf16>, vector<16x16xbf16>, vector<64x16xf32> -> vector<64x16xf32>
    %c0_14 = arith.constant 0 : index
    %c0_15 = arith.constant 0 : index
    %30 = vector.load %arg8[%c0_14, %c0_15] : memref<1x16xf32, #tpu.memory_space<vmem>>, vector<1x16xf32>
    %31 = vector.broadcast %30 : vector<1x16xf32> to vector<64x16xf32>
    %32 = arith.addf %29, %31 : vector<64x16xf32>
    %cst_16 = arith.constant 0.000000e+00 : f32
    %33 = vector.broadcast %cst_16 : f32 to vector<64x16xf32>
    %34 = arith.maximumf %32, %33 : vector<64x16xf32>
    %35 = arith.truncf %34 : vector<64x16xf32> to vector<64x16xbf16>
    %c0_17 = arith.constant 0 : index
    %c0_18 = arith.constant 0 : index
    %36 = vector.load %arg9[%c0_17, %c0_18] : memref<16x16xbf16, #tpu.memory_space<vmem>>, vector<16x16xbf16>
    %cst_19 = arith.constant dense<0.000000e+00> : vector<64x16xf32>
    %37 = tpu.matmul %35, %36, %cst_19 {dimension_numbers = #tpu.dot_dimension_numbers<[1], [0], [0], [1], [0, 0, 1, 1], [], []>} : vector<64x16xbf16>, vector<16x16xbf16>, vector<64x16xf32> -> vector<64x16xf32>
    %c0_20 = arith.constant 0 : index
    %c0_21 = arith.constant 0 : index
    %38 = vector.load %arg10[%c0_20, %c0_21] : memref<1x16xf32, #tpu.memory_space<vmem>>, vector<1x16xf32>
    %39 = vector.broadcast %38 : vector<1x16xf32> to vector<64x16xf32>
    %40 = arith.addf %37, %39 : vector<64x16xf32>
    %41 = vector.shape_cast %40 : vector<64x16xf32> to vector<4x16x16xf32>
    %42 = arith.extf %9 : vector<4x16x16xbf16> to vector<4x16x16xf32>
    %43 = vector.shape_cast %21 : vector<64x16xf32> to vector<4x16x16xf32>
    %44 = arith.addf %42, %43 : vector<4x16x16xf32>
    %cst_22 = arith.constant dense<0xFF800000> : vector<16x16xf32>
    %45 = vector.multi_reduction <maximumf>, %41, %cst_22 [0] : vector<4x16x16xf32> to vector<16x16xf32>
    %46 = vector.shape_cast %45 : vector<16x16xf32> to vector<1x16x16xf32>
    %47 = vector.broadcast %46 : vector<1x16x16xf32> to vector<4x16x16xf32>
    %48 = arith.subf %41, %47 : vector<4x16x16xf32>
    %49 = math.exp %48 : vector<4x16x16xf32>
    %50 = arith.mulf %49, %44 : vector<4x16x16xf32>
    %cst_23 = arith.constant dense<0.000000e+00> : vector<16x16xf32>
    %51 = vector.multi_reduction <add>, %50, %cst_23 [0] : vector<4x16x16xf32> to vector<16x16xf32>
    %cst_24 = arith.constant dense<0.000000e+00> : vector<16x16xf32>
    %52 = vector.multi_reduction <add>, %49, %cst_24 [0] : vector<4x16x16xf32> to vector<16x16xf32>
    %53 = tpu.reciprocal %52 {approx = true} : vector<16x16xf32> -> vector<16x16xf32>
    %54 = arith.mulf %51, %53 : vector<16x16xf32>
    %55 = arith.truncf %54 : vector<16x16xf32> to vector<16x16xbf16>
    %c0_25 = arith.constant 0 : index
    %c0_26 = arith.constant 0 : index
    %56 = vector.load %arg11[%c0_25, %c0_26] : memref<16x16xbf16, #tpu.memory_space<vmem>>, vector<16x16xbf16>
    %cst_27 = arith.constant dense<0.000000e+00> : vector<16x16xf32>
    %57 = tpu.matmul %55, %56, %cst_27 {dimension_numbers = #tpu.dot_dimension_numbers<[1], [0], [0], [1], [0, 0, 1, 1], [], []>} : vector<16x16xbf16>, vector<16x16xbf16>, vector<16x16xf32> -> vector<16x16xf32>
    %c0_28 = arith.constant 0 : index
    %c0_29 = arith.constant 0 : index
    %58 = vector.load %arg12[%c0_28, %c0_29] : memref<1x16xf32, #tpu.memory_space<vmem>>, vector<1x16xf32>
    %59 = vector.broadcast %58 : vector<1x16xf32> to vector<16x16xf32>
    %60 = arith.addf %57, %59 : vector<16x16xf32>
    %c0_30 = arith.constant 0 : index
    %c0_31 = arith.constant 0 : index
    %c0_32 = arith.constant 0 : index
    %61 = vector.load %arg2[%c0_30, %c0_31, %c0_32] : memref<1x16x16xf32, #tpu.memory_space<vmem>>, vector<1x16x16xf32>
    %62 = vector.shape_cast %61 : vector<1x16x16xf32> to vector<16x16xf32>
    %63 = arith.addf %60, %62 : vector<16x16xf32>
    %c0_33 = arith.constant 0 : index
    %c0_34 = arith.constant 0 : index
    %c0_35 = arith.constant 0 : index
    %64 = vector.load %arg13[%c0_33, %c0_34, %c0_35] : memref<1x16x16xf32, #tpu.memory_space<vmem>>, vector<1x16x16xf32>
    %65 = vector.shape_cast %64 : vector<1x16x16xf32> to vector<16x16xf32>
    %66 = vector.shape_cast %63 : vector<16x16xf32> to vector<1x16x16xf32>
    tpu.vector_store %arg13[%c0_33, %c0_34, %c0_35], %66 {strides = array<i32>} : memref<1x16x16xf32, #tpu.memory_space<vmem>>, vector<1x16x16xf32>,
    return
  }
  func.func @transform_0(%arg0: i32, %arg1: i32) -> (i32, i32, i32) {
    %c0_i32 = arith.constant 0 : i32
    %c0_i32_0 = arith.constant 0 : i32
    return %arg0, %arg1, %c0_i32 : i32, i32, i32
  }
  func.func @transform_1(%arg0: i32, %arg1: i32) -> (i32, i32, i32) {
    %c0_i32 = arith.constant 0 : i32
    %c0_i32_0 = arith.constant 0 : i32
    return %arg0, %arg1, %c0_i32 : i32, i32, i32
  }
  func.func @transform_2(%arg0: i32, %arg1: i32) -> (i32, i32, i32, i32) {
    %c0_i32 = arith.constant 0 : i32
    %c0_i32_0 = arith.constant 0 : i32
    %c0_i32_1 = arith.constant 0 : i32
    return %arg0, %c0_i32, %arg1, %c0_i32_0 : i32, i32, i32, i32
  }
  func.func @transform_3(%arg0: i32, %arg1: i32) -> (i32, i32) {
    %c0_i32 = arith.constant 0 : i32
    %c0_i32_0 = arith.constant 0 : i32
    %c0_i32_1 = arith.constant 0 : i32
    return %c0_i32, %c0_i32_0 : i32, i32
  }
  func.func @transform_4(%arg0: i32, %arg1: i32) -> (i32, i32) {
    %c0_i32 = arith.constant 0 : i32
    %c0_i32_0 = arith.constant 0 : i32
    %c0_i32_1 = arith.constant 0 : i32
    return %c0_i32, %c0_i32_0 : i32, i32
  }
  func.func @transform_5(%arg0: i32, %arg1: i32) -> (i32, i32) {
    %c0_i32 = arith.constant 0 : i32
    %c0_i32_0 = arith.constant 0 : i32
    %c0_i32_1 = arith.constant 0 : i32
    return %c0_i32, %c0_i32_0 : i32, i32
  }
  func.func @transform_6(%arg0: i32, %arg1: i32) -> (i32, i32) {
    %c0_i32 = arith.constant 0 : i32
    %c0_i32_0 = arith.constant 0 : i32
    %c0_i32_1 = arith.constant 0 : i32
    return %c0_i32, %c0_i32_0 : i32, i32
  }
  func.func @transform_7(%arg0: i32, %arg1: i32) -> (i32, i32) {
    %c0_i32 = arith.constant 0 : i32
    %c0_i32_0 = arith.constant 0 : i32
    %c0_i32_1 = arith.constant 0 : i32
    return %c0_i32, %c0_i32_0 : i32, i32
  }
  func.func @transform_8(%arg0: i32, %arg1: i32) -> (i32, i32) {
    %c0_i32 = arith.constant 0 : i32
    %c0_i32_0 = arith.constant 0 : i32
    %c0_i32_1 = arith.constant 0 : i32
    return %c0_i32, %c0_i32_0 : i32, i32
  }
  func.func @transform_9(%arg0: i32, %arg1: i32) -> (i32, i32) {
    %c0_i32 = arith.constant 0 : i32
    %c0_i32_0 = arith.constant 0 : i32
    %c0_i32_1 = arith.constant 0 : i32
    return %c0_i32, %c0_i32_0 : i32, i32
  }
  func.func @transform_10(%arg0: i32, %arg1: i32) -> (i32, i32) {
    %c0_i32 = arith.constant 0 : i32
    %c0_i32_0 = arith.constant 0 : i32
    %c0_i32_1 = arith.constant 0 : i32
    return %c0_i32, %c0_i32_0 : i32, i32
  }
  func.func @transform_11(%arg0: i32, %arg1: i32) -> (i32, i32, i32) {
    %c0_i32 = arith.constant 0 : i32
    %c0_i32_0 = arith.constant 0 : i32
    return %arg0, %arg1, %c0_i32 : i32, i32, i32
  }
}

</mosaic_0001>

<llo_original>
// kernel: neg.2
$region0: #{neg.2}
  #allocation0 [shape = 's32[1]{0}', space=sflag, size = 0x4, scoped, tag = 'scoped memory for neg.2']
  %s0 = inlined_call_operand.vmem [shape: f32[2,8,16], index: 0, kind: input, shape index: {}]
  %s1 = inlined_call_operand.vmem [shape: f32[2,8,16], index: 1, kind: output, shape index: {}]
  %v2 = vld [vmem:[%s0] sm:$0xff]
  %3 = xla_tuple %v2
  %4 = xla_tuple %3
  %v5 = vxor.u32 %v2, 2147483648
  %6 = xla_tuple %v5
  %7 = vst [vmem:[%s1] sm:$0xff] %v5
  %s8 = scalar_lea.vmem %s0, 8
  %v9 = vld [vmem:[%s8] sm:$0xff]
  %10 = xla_tuple %v9
  %11 = xla_tuple %10
  %v12 = vxor.u32 %v9, 2147483648
  %13 = xla_tuple %v12
  %s14 = scalar_lea.vmem %s1, 8
  %15 = vst [vmem:[%s14] sm:$0xff] %v12

// kernel: neg.3
$region0: #{neg.3}
  #allocation0 [shape = 's32[1]{0}', space=sflag, size = 0x4, scoped, tag = 'scoped memory for neg.3']
  %s0 = inlined_call_operand.vmem [shape: f32[2,8,8], index: 0, kind: input, shape index: {}]
  %s1 = inlined_call_operand.vmem [shape: f32[2,8,8], index: 1, kind: output, shape index: {}]
  %v2 = vld [vmem:[%s0] sm:$0xff]
  %3 = xla_tuple %v2
  %4 = xla_tuple %3
  %v5 = vxor.u32 %v2, 2147483648
  %6 = xla_tuple %v5
  %7 = vst [vmem:[%s1] sm:$0xff] %v5
  %s8 = scalar_lea.vmem %s0, 8
  %v9 = vld [vmem:[%s8] sm:$0xff]
  %10 = xla_tuple %v9
  %11 = xla_tuple %10
  %v12 = vxor.u32 %v9, 2147483648
  %13 = xla_tuple %v12
  %s14 = scalar_lea.vmem %s1, 8
  %15 = vst [vmem:[%s14] sm:$0xff] %v12

// kernel: tdpt_forward.3
$region0: #{tdpt_forward.3}
  #allocation0 [shape = 'u32[]', space=smem, size = 0x4, offset = 0x4, fixed_abs, tag = 'smem constant byte address 0x4 - core index']
  #allocation1 [shape = 'u32[72,128]{1,0:T(1,128)}', space=vmem, size = 0x9000, scoped, tag = 'internal scratch']
  %s0 = inlined_call_operand.vmem [shape: bf16[2,16,8], index: 0, kind: input, shape index: {}]
  %s1 = inlined_call_operand.vmem [shape: bf16[8,16], index: 1, kind: input, shape index: {}]
  %s2 = inlined_call_operand.vmem [shape: f32[1,16], index: 2, kind: input, shape index: {}]
  %s3 = inlined_call_operand.vmem [shape: bf16[2,16,16], index: 3, kind: output, shape index: {}]
  %s4 = sld [smem:[#allocation0]]
  $region45: #{tdpt_forward.3} parent=0
    _
  %s6 = ssub.s32 1, %s4
  %s7 = scalar_select 0, %s6, %s4
  loop: start=0, step=1, limit=4
  $region2: #{tdpt_forward.3} parent=0 // loop_pre_header
    _
  $region3: #{tdpt_forward.3} parent=0 // loop_header
    %s9 = sphi 0, %s13
    %p10 = scmp.ge.s32.totalorder %s9, 4
    %s16 = sphi 0, %s28
    %s17 = sphi 0, %s24
    %s18 = sphi 0, %s16
    %s19 = sphi 0, %s17
    %s20 = sphi 0, %s18
    %s21 = sphi 0, %s19
    %s33 = sphi 0, %s35
    %s36 = sphi 0, %s33
    %s37 = sphi 0, %s36
    %s53 = sphi 0, %s37
    %s57 = sphi 0, %s57
    %s59 = sphi 0, %s57
    %s60 = sphi 0, %s59
    %s74 = sphi 0, %s60
    %s78 = sphi 0, %s78
    %s80 = sphi 0, %s78
    %s81 = sphi 0, %s80
    %s95 = sphi 0, %s81
    %s103 = sphi 0, %s105
    %s106 = sphi 0, %s103
    %s107 = sphi 0, %s106
    %s123 = sphi 0, %s107
  $region4: #{tdpt_forward.3} parent=0 // loop_header_branch
    %12 = sbr.rel (%p10) target = $region8
  $region5: #{tdpt_forward.3} parent=0 // loop_body
    %s14 = ssub.s32 %s9, 1
    %s15 = ssub.s32 %s9, 2
    %s22 = sadd.s32 1, %s17
    %p23 = scmp.ge.s32.totalorder %s22, 1
    %s24 = scalar_select %p23, 0, %s22
    %s25 = sadd.s32 1, %s16
    %s26 = scalar_select %p23, %s25, %s16
    %p27 = scmp.ge.s32.totalorder %s26, 2
    %s28 = scalar_select %p27, 0, %s26
    %s29 = ssub.s32 %s16, %s28
    %s30 = ssub.s32 %s17, %s24
    %s31 = sor.u32 %s29, %s30
    %p32 = scmp.eq.s32.totalorder %s31, 0
    %s34 = sadd.s32 %s33, 1
    %s35 = scalar_select %p32, %s33, %s34
    %p38 = pneg %p32
    %p39 = scmp.eq.s32.totalorder %s9, 1
    %p40 = por %p38, %p39
    %p41 = scmp.ne.s32.totalorder %s33, %s36
    %p42 = scmp.eq.s32.totalorder %s9, 0
    %p43 = por %p41, %p42
    %p44 = scmp.ne.s32.totalorder %s33, %s36
    %p45 = scmp.eq.s32.totalorder %s14, 1
    %p46 = por %p44, %p45
    %p47 = scmp.ne.s32.totalorder %s36, %s37
    %p48 = scmp.eq.s32.totalorder %s14, 0
    %p49 = por %p47, %p48
    %p50 = scmp.ne.s32.totalorder %s36, %s37
    %p51 = scmp.eq.s32.totalorder %s15, 1
    %p52 = por %p50, %p51
    %p54 = scmp.ne.s32.totalorder %s37, %s53
    %p55 = scmp.eq.s32.totalorder %s15, 0
    %p56 = por %p54, %p55
    %s58 = sadd.s32 %s57, 1
    %p61 = scmp.eq.s32.totalorder %s9, 1
    %p62 = scmp.ne.s32.totalorder %s57, %s59
    %p63 = scmp.eq.s32.totalorder %s9, 0
    %p64 = por %p62, %p63
    %p65 = scmp.ne.s32.totalorder %s57, %s59
    %p66 = scmp.eq.s32.totalorder %s14, 1
    %p67 = por %p65, %p66
    %p68 = scmp.ne.s32.totalorder %s59, %s60
    %p69 = scmp.eq.s32.totalorder %s14, 0
    %p70 = por %p68, %p69
    %p71 = scmp.ne.s32.totalorder %s59, %s60
    %p72 = scmp.eq.s32.totalorder %s15, 1
    %p73 = por %p71, %p72
    %p75 = scmp.ne.s32.totalorder %s60, %s74
    %p76 = scmp.eq.s32.totalorder %s15, 0
    %p77 = por %p75, %p76
    %s79 = sadd.s32 %s78, 1
    %p82 = scmp.eq.s32.totalorder %s9, 1
    %p83 = scmp.ne.s32.totalorder %s78, %s80
    %p84 = scmp.eq.s32.totalorder %s9, 0
    %p85 = por %p83, %p84
    %p86 = scmp.ne.s32.totalorder %s78, %s80
    %p87 = scmp.eq.s32.totalorder %s14, 1
    %p88 = por %p86, %p87
    %p89 = scmp.ne.s32.totalorder %s80, %s81
    %p90 = scmp.eq.s32.totalorder %s14, 0
    %p91 = por %p89, %p90
    %p92 = scmp.ne.s32.totalorder %s80, %s81
    %p93 = scmp.eq.s32.totalorder %s15, 1
    %p94 = por %p92, %p93
    %p96 = scmp.ne.s32.totalorder %s81, %s95
    %p97 = scmp.eq.s32.totalorder %s15, 0
    %p98 = por %p96, %p97
    %s99 = ssub.s32 %s16, %s28
    %s100 = ssub.s32 %s17, %s24
    %s101 = sor.u32 %s99, %s100
    %p102 = scmp.eq.s32.totalorder %s101, 0
    %s104 = sadd.s32 %s103, 1
    %s105 = scalar_select %p102, %s103, %s104
    %p108 = pneg %p102
    %p109 = scmp.eq.s32.totalorder %s9, 1
    %p110 = por %p108, %p109
    %p111 = scmp.ne.s32.totalorder %s103, %s106
    %p112 = scmp.eq.s32.totalorder %s9, 0
    %p113 = por %p111, %p112
    %p114 = scmp.ne.s32.totalorder %s103, %s106
    %p115 = scmp.eq.s32.totalorder %s14, 1
    %p116 = por %p114, %p115
    %p117 = scmp.ne.s32.totalorder %s106, %s107
    %p118 = scmp.eq.s32.totalorder %s14, 0
    %p119 = por %p117, %p118
    %p120 = scmp.ne.s32.totalorder %s106, %s107
    %p121 = scmp.eq.s32.totalorder %s15, 1
    %p122 = por %p120, %p121
    %p124 = scmp.ne.s32.totalorder %s107, %s123
    %p125 = scmp.eq.s32.totalorder %s15, 0
    %p126 = por %p124, %p125
    %p127 = scmp.le.s32.totalorder 1, %s9
    %p128 = scmp.lt.s32.totalorder %s9, 3
    %p129 = pnand %p127, %p128
    %p130 = pneg %p129
    // Predicated region
    $region9: #{tdpt_forward.3} parent=5 // pred_check
      _
    $region10: #{tdpt_forward.3} parent=5 // pred_check_branch
      %132 = sbr.rel (%p129) target = $region12
    $region11: #{tdpt_forward.3} parent=5 // pred_region
      %s133 = ssub.s32 %s9, 1
      // Predicated region
      $region13: #{tdpt_forward.3} parent=11 // pred_check
        %p134 = pneg %p70
      $region14: #{tdpt_forward.3} parent=11 // pred_check_branch
        %136 = sbr.rel (%p134) target = $region16
      $region15: #{tdpt_forward.3} parent=11 // pred_region
        _
      $region16: #{tdpt_forward.3} parent=11 // pred_fallthru
        _
      // Predicated region
      $region17: #{tdpt_forward.3} parent=11 // pred_check
        %p137 = pneg %p91
      $region18: #{tdpt_forward.3} parent=11 // pred_check_branch
        %139 = sbr.rel (%p137) target = $region20
      $region19: #{tdpt_forward.3} parent=11 // pred_region
        _
      $region20: #{tdpt_forward.3} parent=11 // pred_fallthru
        _
    $region12: #{tdpt_forward.3} parent=5 // pred_fallthru
      _
    %p140 = scmp.lt.s32.totalorder %s9, 2
    // Predicated region
    $region21: #{tdpt_forward.3} parent=5 // pred_check
      %p141 = pneg %p140
    $region22: #{tdpt_forward.3} parent=5 // pred_check_branch
      %143 = sbr.rel (%p141) target = $region24
    $region23: #{tdpt_forward.3} parent=5 // pred_region
      // Predicated region
      $region25: #{tdpt_forward.3} parent=23 // pred_check
        %p144 = pneg %p43
      $region26: #{tdpt_forward.3} parent=23 // pred_check_branch
        %146 = sbr.rel (%p144) target = $region28
      $region27: #{tdpt_forward.3} parent=23 // pred_region
        %s147 = smul.u32 2, %s17
        %p148 = scmp.lt.s32.totalorder %s16, 1
        %s149 = scalar_select %p148, %s16, 1
        %p150 = scmp.lt.s32.totalorder %s147, 1
        %s151 = scalar_select %p150, %s147, 1
        %s152 = smul.addr %s149, 2
        %s153 = sadd.s32 %s151, %s152
        %s154 = smul.addr %s153, 4
        %s155 = scalar_lea.vmem %s0, %s154
        %s156 = smul.u32 2, %s17
      $region28: #{tdpt_forward.3} parent=23 // pred_fallthru
        _
    $region24: #{tdpt_forward.3} parent=5 // pred_fallthru
      _
    %p157 = scmp.le.s32.totalorder 1, %s9
    %p158 = scmp.lt.s32.totalorder %s9, 3
    %p159 = pnand %p157, %p158
    %p160 = pneg %p159
    // Predicated region
    $region29: #{tdpt_forward.3} parent=5 // pred_check
      _
    $region30: #{tdpt_forward.3} parent=5 // pred_check_branch
      %162 = sbr.rel (%p159) target = $region32
    $region31: #{tdpt_forward.3} parent=5 // pred_region
      %s163 = ssub.s32 %s9, 1
      %s164 = smul.u32 2, %s19
      %p165 = scmp.lt.s32.totalorder %s18, 1
      %s166 = scalar_select %p165, %s18, 1
      %p167 = scmp.lt.s32.totalorder %s164, 1
      %s168 = scalar_select %p167, %s164, 1
      %s169 = smul.addr %s166, 2
      %s170 = sadd.s32 %s168, %s169
      %s171 = smul.addr %s170, 4
      %s172 = scalar_lea.vmem %s0, %s171
      %p173 = pneg %p49
      %p174 = pneg %p46
      %p175 = pneg %p70
      %p176 = pneg %p67
      %p177 = pneg %p91
      %p178 = pneg %p88
      %p179 = pneg %p119
      %p180 = pneg %p116
      %s181 = smul.u32 2, %s19
      %p182 = scmp.lt.s32.totalorder %s18, 1
      %s183 = scalar_select %p182, %s18, 1
      %p184 = scmp.lt.s32.totalorder %s181, 1
      %s185 = scalar_select %p184, %s181, 1
      %s186 = smul.addr %s183, 2
      %s187 = sadd.s32 %s185, %s186
      %s188 = smul.addr %s187, 4
      %s189 = scalar_lea.vmem %s3, %s188
      %s190 = smul.u32 2, %s19
      %p191 = scmp.lt.s32.totalorder %s18, 1
      %s192 = scalar_select %p191, %s18, 1
      %p193 = scmp.lt.s32.totalorder %s190, 1
      %s194 = scalar_select %p193, %s190, 1
      %s195 = smul.addr %s192, 2
      %s196 = sadd.s32 %s194, %s195
      %s197 = smul.addr %s196, 4
      %s198 = scalar_lea.vmem %s0, %s197
      %s199 = smul.u32 2, %s19
      %s200 = smul.u32 2, %s19
      %p201 = scmp.lt.s32.totalorder %s18, 1
      %s202 = scalar_select %p201, %s18, 1
      %p203 = scmp.lt.s32.totalorder %s200, 1
      %s204 = scalar_select %p203, %s200, 1
      %s205 = smul.addr %s202, 2
      %s206 = sadd.s32 %s204, %s205
      %s207 = smul.addr %s206, 4
      %s208 = scalar_lea.vmem %s3, %s207
      %s209 = smul.u32 2, %s19
      %v211 = vld [vmem:[%s198] sm:$0xf]
      %v212 = vld [vmem:[%s198 + $0x4] sm:$0xf]
      %v213 = vld [vmem:[%s1] sm:$0xf]
      %v214 = vld [vmem:[%s2] sm:$0x1]
      %v216 = vperm.slane %v214, 0
      %v220 = vunpack.c.l.b16 %v211
      %v221 = vunpack.c.l.b16 %v212
      %v222 = vpack.c.b16 %v221, %v220
      %vm223 = vcmask 64512
      %v225 = vsel %vm223, %v222, 0
      %vm227 = vcmask 1043456
      %v229 = vsel %vm227, %v213, 0
      %231 = vmatpush.bf16.msra.mxu0 0
      %232 = vmatpush.bf16.msra.mxu0 0
      %233 = vmatpush.bf16.msra.mxu0 0
      %234 = vmatpush.bf16.msra.mxu0 0
      %235 = vmatpush.bf16.msra.mxu0 0
      %236 = vmatpush.bf16.msra.mxu0 0
      %237 = vmatpush.bf16.msra.mxu0 0
      %238 = vmatpush.bf16.msra.mxu0 %v229
      %239 = vmatmul.bf16.gmra.mxu0 %v225
      %v240 = vpop.f32.mrf.mxu0
      %v241 = vadd.f32 %v216, %v240
      %v242 = vpop.f32.mrf.mxu0
      %v243 = vadd.f32 %v216, %v242
      %244 = vdwg.mxu0
      %v245 = vmax.f32 %v241, 0.0
      %v246 = vmax.f32 %v243, 0.0
      %v247 = vpack.c.bf16 %v245, %v245
      %v248 = vpack.c.bf16 %v246, %v246
      %vm249 = vcmask 125952
      %250 = vst.msk [vmem:[%s208] sm:$0xf] %vm249, %v247
      %251 = vst.msk [vmem:[%s208 + $0x4] sm:$0xf] %vm249, %v248
      %s252 = smul.u32 2, %s19
      %p253 = scmp.lt.s32.totalorder %s18, 1
      %s254 = scalar_select %p253, %s18, 1
      %p255 = scmp.lt.s32.totalorder %s252, 1
      %s256 = scalar_select %p255, %s252, 1
      %s257 = smul.addr %s254, 2
      %s258 = sadd.s32 %s256, %s257
      %s259 = smul.addr %s258, 4
      %s260 = scalar_lea.vmem %s3, %s259
      // Predicated region
      $region33: #{tdpt_forward.3} parent=31 // pred_check
        %p261 = pneg %p116
      $region34: #{tdpt_forward.3} parent=31 // pred_check_branch
        %263 = sbr.rel (%p261) target = $region36
      $region35: #{tdpt_forward.3} parent=31 // pred_region
        %s264 = smul.u32 2, %s19
      $region36: #{tdpt_forward.3} parent=31 // pred_fallthru
        _
    $region32: #{tdpt_forward.3} parent=5 // pred_fallthru
      _
    %p265 = scmp.le.s32.totalorder 2, %s9
    // Predicated region
    $region37: #{tdpt_forward.3} parent=5 // pred_check
      %p266 = pneg %p265
    $region38: #{tdpt_forward.3} parent=5 // pred_check_branch
      %268 = sbr.rel (%p266) target = $region40
    $region39: #{tdpt_forward.3} parent=5 // pred_region
      %s269 = ssub.s32 %s9, 2
      // Predicated region
      $region41: #{tdpt_forward.3} parent=39 // pred_check
        %p270 = pneg %p122
      $region42: #{tdpt_forward.3} parent=39 // pred_check_branch
        %272 = sbr.rel (%p270) target = $region44
      $region43: #{tdpt_forward.3} parent=39 // pred_region
        %s273 = smul.u32 2, %s21
        %p274 = scmp.lt.s32.totalorder %s20, 1
        %s275 = scalar_select %p274, %s20, 1
        %p276 = scmp.lt.s32.totalorder %s273, 1
        %s277 = scalar_select %p276, %s273, 1
        %s278 = smul.addr %s275, 2
        %s279 = sadd.s32 %s277, %s278
        %s280 = smul.addr %s279, 4
        %s281 = scalar_lea.vmem %s3, %s280
      $region44: #{tdpt_forward.3} parent=39 // pred_fallthru
        _
    $region40: #{tdpt_forward.3} parent=5 // pred_fallthru
      _
  $region6: #{tdpt_forward.3} parent=0 // loop_footer
    %s13 = sadd.s32 1, %s9
  $region7: #{tdpt_forward.3} parent=0 // loop_footer_branch
    %8 = sbr.rel target = $region3
  $region8: #{tdpt_forward.3} parent=0 // loop_exit
    _

// kernel: tdpt_forward.4
$region0: #{tdpt_forward.4}
  #allocation0 [shape = 'u32[]', space=smem, size = 0x4, offset = 0x4, fixed_abs, tag = 'smem constant byte address 0x4 - core index']
  #allocation1 [shape = 'u32[72,128]{1,0:T(1,128)}', space=vmem, size = 0x9000, scoped, tag = 'internal scratch']
  %s0 = inlined_call_operand.vmem [shape: bf16[2,4,16,16], index: 0, kind: input, shape index: {}]
  %s1 = inlined_call_operand.vmem [shape: bf16[2,16,16], index: 1, kind: input, shape index: {}]
  %s2 = inlined_call_operand.vmem [shape: bf16[16,16], index: 2, kind: input, shape index: {}]
  %s3 = inlined_call_operand.vmem [shape: f32[1,16], index: 3, kind: input, shape index: {}]
  %s4 = inlined_call_operand.vmem [shape: bf16[16,48], index: 4, kind: input, shape index: {}]
  %s5 = inlined_call_operand.vmem [shape: f32[1,48], index: 5, kind: input, shape index: {}]
  %s6 = inlined_call_operand.vmem [shape: bf16[16,16], index: 6, kind: input, shape index: {}]
  %s7 = inlined_call_operand.vmem [shape: f32[1,16], index: 7, kind: input, shape index: {}]
  %s8 = inlined_call_operand.vmem [shape: f32[2,16,16], index: 8, kind: output, shape index: {0}]
  %s9 = inlined_call_operand.vmem [shape: f32[2,16,32], index: 9, kind: output, shape index: {1}]
  %s10 = inlined_call_operand.vmem [shape: bf16[2,16,48], index: 10, kind: output, shape index: {2}]
  %11 = xla_tuple %s8, %s9, %s10
  %s12 = sld [smem:[#allocation0]]
  $region81: #{tdpt_forward.4} parent=0
    _
  %s14 = ssub.s32 1, %s12
  %s15 = scalar_select 0, %s14, %s12
  loop: start=0, step=1, limit=4
  $region2: #{tdpt_forward.4} parent=0 // loop_pre_header
    _
  $region3: #{tdpt_forward.4} parent=0 // loop_header
    %s17 = sphi 0, %s21
    %p18 = scmp.ge.s32.totalorder %s17, 4
    %s24 = sphi 0, %s36
    %s25 = sphi 0, %s32
    %s26 = sphi 0, %s24
    %s27 = sphi 0, %s25
    %s28 = sphi 0, %s26
    %s29 = sphi 0, %s27
    %s41 = sphi 0, %s43
    %s44 = sphi 0, %s41
    %s45 = sphi 0, %s44
    %s61 = sphi 0, %s45
    %s69 = sphi 0, %s71
    %s72 = sphi 0, %s69
    %s73 = sphi 0, %s72
    %s89 = sphi 0, %s73
    %s93 = sphi 0, %s93
    %s95 = sphi 0, %s93
    %s96 = sphi 0, %s95
    %s110 = sphi 0, %s96
    %s114 = sphi 0, %s114
    %s116 = sphi 0, %s114
    %s117 = sphi 0, %s116
    %s131 = sphi 0, %s117
    %s135 = sphi 0, %s135
    %s137 = sphi 0, %s135
    %s138 = sphi 0, %s137
    %s152 = sphi 0, %s138
    %s156 = sphi 0, %s156
    %s158 = sphi 0, %s156
    %s159 = sphi 0, %s158
    %s173 = sphi 0, %s159
    %s177 = sphi 0, %s177
    %s179 = sphi 0, %s177
    %s180 = sphi 0, %s179
    %s194 = sphi 0, %s180
    %s198 = sphi 0, %s198
    %s200 = sphi 0, %s198
    %s201 = sphi 0, %s200
    %s215 = sphi 0, %s201
    %s223 = sphi 0, %s225
    %s226 = sphi 0, %s223
    %s227 = sphi 0, %s226
    %s243 = sphi 0, %s227
    %s251 = sphi 0, %s253
    %s254 = sphi 0, %s251
    %s255 = sphi 0, %s254
    %s271 = sphi 0, %s255
    %s279 = sphi 0, %s281
    %s282 = sphi 0, %s279
    %s283 = sphi 0, %s282
    %s299 = sphi 0, %s283
  $region4: #{tdpt_forward.4} parent=0 // loop_header_branch
    %20 = sbr.rel (%p18) target = $region8
  $region5: #{tdpt_forward.4} parent=0 // loop_body
    %s22 = ssub.s32 %s17, 1
    %s23 = ssub.s32 %s17, 2
    %s30 = sadd.s32 1, %s25
    %p31 = scmp.ge.s32.totalorder %s30, 1
    %s32 = scalar_select %p31, 0, %s30
    %s33 = sadd.s32 1, %s24
    %s34 = scalar_select %p31, %s33, %s24
    %p35 = scmp.ge.s32.totalorder %s34, 2
    %s36 = scalar_select %p35, 0, %s34
    %s37 = ssub.s32 %s24, %s36
    %s38 = ssub.s32 %s25, %s32
    %s39 = sor.u32 %s37, %s38
    %p40 = scmp.eq.s32.totalorder %s39, 0
    %s42 = sadd.s32 %s41, 1
    %s43 = scalar_select %p40, %s41, %s42
    %p46 = pneg %p40
    %p47 = scmp.eq.s32.totalorder %s17, 1
    %p48 = por %p46, %p47
    %p49 = scmp.ne.s32.totalorder %s41, %s44
    %p50 = scmp.eq.s32.totalorder %s17, 0
    %p51 = por %p49, %p50
    %p52 = scmp.ne.s32.totalorder %s41, %s44
    %p53 = scmp.eq.s32.totalorder %s22, 1
    %p54 = por %p52, %p53
    %p55 = scmp.ne.s32.totalorder %s44, %s45
    %p56 = scmp.eq.s32.totalorder %s22, 0
    %p57 = por %p55, %p56
    %p58 = scmp.ne.s32.totalorder %s44, %s45
    %p59 = scmp.eq.s32.totalorder %s23, 1
    %p60 = por %p58, %p59
    %p62 = scmp.ne.s32.totalorder %s45, %s61
    %p63 = scmp.eq.s32.totalorder %s23, 0
    %p64 = por %p62, %p63
    %s65 = ssub.s32 %s24, %s36
    %s66 = ssub.s32 %s25, %s32
    %s67 = sor.u32 %s65, %s66
    %p68 = scmp.eq.s32.totalorder %s67, 0
    %s70 = sadd.s32 %s69, 1
    %s71 = scalar_select %p68, %s69, %s70
    %p74 = pneg %p68
    %p75 = scmp.eq.s32.totalorder %s17, 1
    %p76 = por %p74, %p75
    %p77 = scmp.ne.s32.totalorder %s69, %s72
    %p78 = scmp.eq.s32.totalorder %s17, 0
    %p79 = por %p77, %p78
    %p80 = scmp.ne.s32.totalorder %s69, %s72
    %p81 = scmp.eq.s32.totalorder %s22, 1
    %p82 = por %p80, %p81
    %p83 = scmp.ne.s32.totalorder %s72, %s73
    %p84 = scmp.eq.s32.totalorder %s22, 0
    %p85 = por %p83, %p84
    %p86 = scmp.ne.s32.totalorder %s72, %s73
    %p87 = scmp.eq.s32.totalorder %s23, 1
    %p88 = por %p86, %p87
    %p90 = scmp.ne.s32.totalorder %s73, %s89
    %p91 = scmp.eq.s32.totalorder %s23, 0
    %p92 = por %p90, %p91
    %s94 = sadd.s32 %s93, 1
    %p97 = scmp.eq.s32.totalorder %s17, 1
    %p98 = scmp.ne.s32.totalorder %s93, %s95
    %p99 = scmp.eq.s32.totalorder %s17, 0
    %p100 = por %p98, %p99
    %p101 = scmp.ne.s32.totalorder %s93, %s95
    %p102 = scmp.eq.s32.totalorder %s22, 1
    %p103 = por %p101, %p102
    %p104 = scmp.ne.s32.totalorder %s95, %s96
    %p105 = scmp.eq.s32.totalorder %s22, 0
    %p106 = por %p104, %p105
    %p107 = scmp.ne.s32.totalorder %s95, %s96
    %p108 = scmp.eq.s32.totalorder %s23, 1
    %p109 = por %p107, %p108
    %p111 = scmp.ne.s32.totalorder %s96, %s110
    %p112 = scmp.eq.s32.totalorder %s23, 0
    %p113 = por %p111, %p112
    %s115 = sadd.s32 %s114, 1
    %p118 = scmp.eq.s32.totalorder %s17, 1
    %p119 = scmp.ne.s32.totalorder %s114, %s116
    %p120 = scmp.eq.s32.totalorder %s17, 0
    %p121 = por %p119, %p120
    %p122 = scmp.ne.s32.totalorder %s114, %s116
    %p123 = scmp.eq.s32.totalorder %s22, 1
    %p124 = por %p122, %p123
    %p125 = scmp.ne.s32.totalorder %s116, %s117
    %p126 = scmp.eq.s32.totalorder %s22, 0
    %p127 = por %p125, %p126
    %p128 = scmp.ne.s32.totalorder %s116, %s117
    %p129 = scmp.eq.s32.totalorder %s23, 1
    %p130 = por %p128, %p129
    %p132 = scmp.ne.s32.totalorder %s117, %s131
    %p133 = scmp.eq.s32.totalorder %s23, 0
    %p134 = por %p132, %p133
    %s136 = sadd.s32 %s135, 1
    %p139 = scmp.eq.s32.totalorder %s17, 1
    %p140 = scmp.ne.s32.totalorder %s135, %s137
    %p141 = scmp.eq.s32.totalorder %s17, 0
    %p142 = por %p140, %p141
    %p143 = scmp.ne.s32.totalorder %s135, %s137
    %p144 = scmp.eq.s32.totalorder %s22, 1
    %p145 = por %p143, %p144
    %p146 = scmp.ne.s32.totalorder %s137, %s138
    %p147 = scmp.eq.s32.totalorder %s22, 0
    %p148 = por %p146, %p147
    %p149 = scmp.ne.s32.totalorder %s137, %s138
    %p150 = scmp.eq.s32.totalorder %s23, 1
    %p151 = por %p149, %p150
    %p153 = scmp.ne.s32.totalorder %s138, %s152
    %p154 = scmp.eq.s32.totalorder %s23, 0
    %p155 = por %p153, %p154
    %s157 = sadd.s32 %s156, 1
    %p160 = scmp.eq.s32.totalorder %s17, 1
    %p161 = scmp.ne.s32.totalorder %s156, %s158
    %p162 = scmp.eq.s32.totalorder %s17, 0
    %p163 = por %p161, %p162
    %p164 = scmp.ne.s32.totalorder %s156, %s158
    %p165 = scmp.eq.s32.totalorder %s22, 1
    %p166 = por %p164, %p165
    %p167 = scmp.ne.s32.totalorder %s158, %s159
    %p168 = scmp.eq.s32.totalorder %s22, 0
    %p169 = por %p167, %p168
    %p170 = scmp.ne.s32.totalorder %s158, %s159
    %p171 = scmp.eq.s32.totalorder %s23, 1
    %p172 = por %p170, %p171
    %p174 = scmp.ne.s32.totalorder %s159, %s173
    %p175 = scmp.eq.s32.totalorder %s23, 0
    %p176 = por %p174, %p175
    %s178 = sadd.s32 %s177, 1
    %p181 = scmp.eq.s32.totalorder %s17, 1
    %p182 = scmp.ne.s32.totalorder %s177, %s179
    %p183 = scmp.eq.s32.totalorder %s17, 0
    %p184 = por %p182, %p183
    %p185 = scmp.ne.s32.totalorder %s177, %s179
    %p186 = scmp.eq.s32.totalorder %s22, 1
    %p187 = por %p185, %p186
    %p188 = scmp.ne.s32.totalorder %s179, %s180
    %p189 = scmp.eq.s32.totalorder %s22, 0
    %p190 = por %p188, %p189
    %p191 = scmp.ne.s32.totalorder %s179, %s180
    %p192 = scmp.eq.s32.totalorder %s23, 1
    %p193 = por %p191, %p192
    %p195 = scmp.ne.s32.totalorder %s180, %s194
    %p196 = scmp.eq.s32.totalorder %s23, 0
    %p197 = por %p195, %p196
    %s199 = sadd.s32 %s198, 1
    %p202 = scmp.eq.s32.totalorder %s17, 1
    %p203 = scmp.ne.s32.totalorder %s198, %s200
    %p204 = scmp.eq.s32.totalorder %s17, 0
    %p205 = por %p203, %p204
    %p206 = scmp.ne.s32.totalorder %s198, %s200
    %p207 = scmp.eq.s32.totalorder %s22, 1
    %p208 = por %p206, %p207
    %p209 = scmp.ne.s32.totalorder %s200, %s201
    %p210 = scmp.eq.s32.totalorder %s22, 0
    %p211 = por %p209, %p210
    %p212 = scmp.ne.s32.totalorder %s200, %s201
    %p213 = scmp.eq.s32.totalorder %s23, 1
    %p214 = por %p212, %p213
    %p216 = scmp.ne.s32.totalorder %s201, %s215
    %p217 = scmp.eq.s32.totalorder %s23, 0
    %p218 = por %p216, %p217
    %s219 = ssub.s32 %s24, %s36
    %s220 = ssub.s32 %s25, %s32
    %s221 = sor.u32 %s219, %s220
    %p222 = scmp.eq.s32.totalorder %s221, 0
    %s224 = sadd.s32 %s223, 1
    %s225 = scalar_select %p222, %s223, %s224
    %p228 = pneg %p222
    %p229 = scmp.eq.s32.totalorder %s17, 1
    %p230 = por %p228, %p229
    %p231 = scmp.ne.s32.totalorder %s223, %s226
    %p232 = scmp.eq.s32.totalorder %s17, 0
    %p233 = por %p231, %p232
    %p234 = scmp.ne.s32.totalorder %s223, %s226
    %p235 = scmp.eq.s32.totalorder %s22, 1
    %p236 = por %p234, %p235
    %p237 = scmp.ne.s32.totalorder %s226, %s227
    %p238 = scmp.eq.s32.totalorder %s22, 0
    %p239 = por %p237, %p238
    %p240 = scmp.ne.s32.totalorder %s226, %s227
    %p241 = scmp.eq.s32.totalorder %s23, 1
    %p242 = por %p240, %p241
    %p244 = scmp.ne.s32.totalorder %s227, %s243
    %p245 = scmp.eq.s32.totalorder %s23, 0
    %p246 = por %p244, %p245
    %s247 = ssub.s32 %s24, %s36
    %s248 = ssub.s32 %s25, %s32
    %s249 = sor.u32 %s247, %s248
    %p250 = scmp.eq.s32.totalorder %s249, 0
    %s252 = sadd.s32 %s251, 1
    %s253 = scalar_select %p250, %s251, %s252
    %p256 = pneg %p250
    %p257 = scmp.eq.s32.totalorder %s17, 1
    %p258 = por %p256, %p257
    %p259 = scmp.ne.s32.totalorder %s251, %s254
    %p260 = scmp.eq.s32.totalorder %s17, 0
    %p261 = por %p259, %p260
    %p262 = scmp.ne.s32.totalorder %s251, %s254
    %p263 = scmp.eq.s32.totalorder %s22, 1
    %p264 = por %p262, %p263
    %p265 = scmp.ne.s32.totalorder %s254, %s255
    %p266 = scmp.eq.s32.totalorder %s22, 0
    %p267 = por %p265, %p266
    %p268 = scmp.ne.s32.totalorder %s254, %s255
    %p269 = scmp.eq.s32.totalorder %s23, 1
    %p270 = por %p268, %p269
    %p272 = scmp.ne.s32.totalorder %s255, %s271
    %p273 = scmp.eq.s32.totalorder %s23, 0
    %p274 = por %p272, %p273
    %s275 = ssub.s32 %s24, %s36
    %s276 = ssub.s32 %s25, %s32
    %s277 = sor.u32 %s275, %s276
    %p278 = scmp.eq.s32.totalorder %s277, 0
    %s280 = sadd.s32 %s279, 1
    %s281 = scalar_select %p278, %s279, %s280
    %p284 = pneg %p278
    %p285 = scmp.eq.s32.totalorder %s17, 1
    %p286 = por %p284, %p285
    %p287 = scmp.ne.s32.totalorder %s279, %s282
    %p288 = scmp.eq.s32.totalorder %s17, 0
    %p289 = por %p287, %p288
    %p290 = scmp.ne.s32.totalorder %s279, %s282
    %p291 = scmp.eq.s32.totalorder %s22, 1
    %p292 = por %p290, %p291
    %p293 = scmp.ne.s32.totalorder %s282, %s283
    %p294 = scmp.eq.s32.totalorder %s22, 0
    %p295 = por %p293, %p294
    %p296 = scmp.ne.s32.totalorder %s282, %s283
    %p297 = scmp.eq.s32.totalorder %s23, 1
    %p298 = por %p296, %p297
    %p300 = scmp.ne.s32.totalorder %s283, %s299
    %p301 = scmp.eq.s32.totalorder %s23, 0
    %p302 = por %p300, %p301
    %p303 = scmp.le.s32.totalorder 1, %s17
    %p304 = scmp.lt.s32.totalorder %s17, 3
    %p305 = pnand %p303, %p304
    %p306 = pneg %p305
    // Predicated region
    $region9: #{tdpt_forward.4} parent=5 // pred_check
      _
    $region10: #{tdpt_forward.4} parent=5 // pred_check_branch
      %308 = sbr.rel (%p305) target = $region12
    $region11: #{tdpt_forward.4} parent=5 // pred_region
      %s309 = ssub.s32 %s17, 1
      // Predicated region
      $region13: #{tdpt_forward.4} parent=11 // pred_check
        %p310 = pneg %p106
      $region14: #{tdpt_forward.4} parent=11 // pred_check_branch
        %312 = sbr.rel (%p310) target = $region16
      $region15: #{tdpt_forward.4} parent=11 // pred_region
        _
      $region16: #{tdpt_forward.4} parent=11 // pred_fallthru
        _
      // Predicated region
      $region17: #{tdpt_forward.4} parent=11 // pred_check
        %p313 = pneg %p127
      $region18: #{tdpt_forward.4} parent=11 // pred_check_branch
        %315 = sbr.rel (%p313) target = $region20
      $region19: #{tdpt_forward.4} parent=11 // pred_region
        _
      $region20: #{tdpt_forward.4} parent=11 // pred_fallthru
        _
      // Predicated region
      $region21: #{tdpt_forward.4} parent=11 // pred_check
        %p316 = pneg %p148
      $region22: #{tdpt_forward.4} parent=11 // pred_check_branch
        %318 = sbr.rel (%p316) target = $region24
      $region23: #{tdpt_forward.4} parent=11 // pred_region
        _
      $region24: #{tdpt_forward.4} parent=11 // pred_fallthru
        _
      // Predicated region
      $region25: #{tdpt_forward.4} parent=11 // pred_check
        %p319 = pneg %p169
      $region26: #{tdpt_forward.4} parent=11 // pred_check_branch
        %321 = sbr.rel (%p319) target = $region28
      $region27: #{tdpt_forward.4} parent=11 // pred_region
        _
      $region28: #{tdpt_forward.4} parent=11 // pred_fallthru
        _
      // Predicated region
      $region29: #{tdpt_forward.4} parent=11 // pred_check
        %p322 = pneg %p190
      $region30: #{tdpt_forward.4} parent=11 // pred_check_branch
        %324 = sbr.rel (%p322) target = $region32
      $region31: #{tdpt_forward.4} parent=11 // pred_region
        _
      $region32: #{tdpt_forward.4} parent=11 // pred_fallthru
        _
      // Predicated region
      $region33: #{tdpt_forward.4} parent=11 // pred_check
        %p325 = pneg %p211
      $region34: #{tdpt_forward.4} parent=11 // pred_check_branch
        %327 = sbr.rel (%p325) target = $region36
      $region35: #{tdpt_forward.4} parent=11 // pred_region
        _
      $region36: #{tdpt_forward.4} parent=11 // pred_fallthru
        _
    $region12: #{tdpt_forward.4} parent=5 // pred_fallthru
      _
    %p328 = scmp.lt.s32.totalorder %s17, 2
    // Predicated region
    $region37: #{tdpt_forward.4} parent=5 // pred_check
      %p329 = pneg %p328
    $region38: #{tdpt_forward.4} parent=5 // pred_check_branch
      %331 = sbr.rel (%p329) target = $region40
    $region39: #{tdpt_forward.4} parent=5 // pred_region
      // Predicated region
      $region41: #{tdpt_forward.4} parent=39 // pred_check
        %p332 = pneg %p51
      $region42: #{tdpt_forward.4} parent=39 // pred_check_branch
        %334 = sbr.rel (%p332) target = $region44
      $region43: #{tdpt_forward.4} parent=39 // pred_region
        %s335 = smul.u32 2, %s25
        %p336 = scmp.lt.s32.totalorder %s24, 1
        %s337 = scalar_select %p336, %s24, 1
        %p338 = scmp.lt.s32.totalorder %s335, 1
        %s339 = scalar_select %p338, %s335, 1
        %s340 = smul.addr %s337, 8
        %s341 = sadd.s32 %s339, %s340
        %s342 = smul.addr %s341, 4
        %s343 = scalar_lea.vmem %s0, %s342
        %s344 = smul.u32 2, %s25
      $region44: #{tdpt_forward.4} parent=39 // pred_fallthru
        _
      // Predicated region
      $region45: #{tdpt_forward.4} parent=39 // pred_check
        %p345 = pneg %p79
      $region46: #{tdpt_forward.4} parent=39 // pred_check_branch
        %347 = sbr.rel (%p345) target = $region48
      $region47: #{tdpt_forward.4} parent=39 // pred_region
        %s348 = smul.u32 2, %s25
        %p349 = scmp.lt.s32.totalorder %s24, 1
        %s350 = scalar_select %p349, %s24, 1
        %p351 = scmp.lt.s32.totalorder %s348, 1
        %s352 = scalar_select %p351, %s348, 1
        %s353 = smul.addr %s350, 2
        %s354 = sadd.s32 %s352, %s353
        %s355 = smul.addr %s354, 4
        %s356 = scalar_lea.vmem %s1, %s355
        %s357 = smul.u32 2, %s25
      $region48: #{tdpt_forward.4} parent=39 // pred_fallthru
        _
    $region40: #{tdpt_forward.4} parent=5 // pred_fallthru
      _
    %p358 = scmp.le.s32.totalorder 1, %s17
    %p359 = scmp.lt.s32.totalorder %s17, 3
    %p360 = pnand %p358, %p359
    %p361 = pneg %p360
    // Predicated region
    $region49: #{tdpt_forward.4} parent=5 // pred_check
      _
    $region50: #{tdpt_forward.4} parent=5 // pred_check_branch
      %363 = sbr.rel (%p360) target = $region52
    $region51: #{tdpt_forward.4} parent=5 // pred_region
      %s364 = ssub.s32 %s17, 1
      %s365 = smul.u32 2, %s27
      %p366 = scmp.lt.s32.totalorder %s26, 1
      %s367 = scalar_select %p366, %s26, 1
      %p368 = scmp.lt.s32.totalorder %s365, 1
      %s369 = scalar_select %p368, %s365, 1
      %s370 = smul.addr %s367, 8
      %s371 = sadd.s32 %s369, %s370
      %s372 = smul.addr %s371, 4
      %s373 = scalar_lea.vmem %s0, %s372
      %p374 = pneg %p57
      %p375 = pneg %p54
      %s376 = smul.u32 2, %s27
      %p377 = scmp.lt.s32.totalorder %s26, 1
      %s378 = scalar_select %p377, %s26, 1
      %p379 = scmp.lt.s32.totalorder %s376, 1
      %s380 = scalar_select %p379, %s376, 1
      %s381 = smul.addr %s378, 2
      %s382 = sadd.s32 %s380, %s381
      %s383 = smul.addr %s382, 4
      %s384 = scalar_lea.vmem %s1, %s383
      %p385 = pneg %p85
      %p386 = pneg %p82
      %p387 = pneg %p106
      %p388 = pneg %p103
      %p389 = pneg %p127
      %p390 = pneg %p124
      %p391 = pneg %p148
      %p392 = pneg %p145
      %p393 = pneg %p169
      %p394 = pneg %p166
      %p395 = pneg %p190
      %p396 = pneg %p187
      %p397 = pneg %p211
      %p398 = pneg %p208
      %p399 = pneg %p239
      %p400 = pneg %p236
      %s401 = smul.u32 2, %s27
      %p402 = scmp.lt.s32.totalorder %s26, 1
      %s403 = scalar_select %p402, %s26, 1
      %p404 = scmp.lt.s32.totalorder %s401, 1
      %s405 = scalar_select %p404, %s401, 1
      %s406 = smul.addr %s403, 2
      %s407 = sadd.s32 %s405, %s406
      %s408 = smul.addr %s407, 8
      %s409 = scalar_lea.vmem %s8, %s408
      %p410 = pneg %p267
      %p411 = pneg %p264
      %s412 = smul.u32 2, %s27
      %p413 = scmp.lt.s32.totalorder %s26, 1
      %s414 = scalar_select %p413, %s26, 1
      %p415 = scmp.lt.s32.totalorder %s412, 1
      %s416 = scalar_select %p415, %s412, 1
      %s417 = smul.addr %s414, 2
      %s418 = sadd.s32 %s416, %s417
      %s419 = smul.addr %s418, 8
      %s420 = scalar_lea.vmem %s9, %s419
      %p421 = pneg %p295
      %p422 = pneg %p292
      %s423 = smul.u32 2, %s27
      %p424 = scmp.lt.s32.totalorder %s26, 1
      %s425 = scalar_select %p424, %s26, 1
      %p426 = scmp.lt.s32.totalorder %s423, 1
      %s427 = scalar_select %p426, %s423, 1
      %s428 = smul.addr %s425, 2
      %s429 = sadd.s32 %s427, %s428
      %s430 = smul.addr %s429, 4
      %s431 = scalar_lea.vmem %s10, %s430
      %s432 = smul.u32 2, %s27
      %p433 = scmp.lt.s32.totalorder %s26, 1
      %s434 = scalar_select %p433, %s26, 1
      %p435 = scmp.lt.s32.totalorder %s432, 1
      %s436 = scalar_select %p435, %s432, 1
      %s437 = smul.addr %s434, 8
      %s438 = sadd.s32 %s436, %s437
      %s439 = smul.addr %s438, 4
      %s440 = scalar_lea.vmem %s0, %s439
      %s441 = smul.u32 2, %s27
      %s442 = smul.u32 2, %s27
      %p443 = scmp.lt.s32.totalorder %s26, 1
      %s444 = scalar_select %p443, %s26, 1
      %p445 = scmp.lt.s32.totalorder %s442, 1
      %s446 = scalar_select %p445, %s442, 1
      %s447 = smul.addr %s444, 2
      %s448 = sadd.s32 %s446, %s447
      %s449 = smul.addr %s448, 4
      %s450 = scalar_lea.vmem %s1, %s449
      %s451 = smul.u32 2, %s27
      %s452 = smul.u32 2, %s27
      %p453 = scmp.lt.s32.totalorder %s26, 1
      %s454 = scalar_select %p453, %s26, 1
      %p455 = scmp.lt.s32.totalorder %s452, 1
      %s456 = scalar_select %p455, %s452, 1
      %s457 = smul.addr %s454, 2
      %s458 = sadd.s32 %s456, %s457
      %s459 = smul.addr %s458, 8
      %s460 = scalar_lea.vmem %s8, %s459
      %s461 = smul.u32 2, %s27
      %s462 = smul.u32 2, %s27
      %p463 = scmp.lt.s32.totalorder %s26, 1
      %s464 = scalar_select %p463, %s26, 1
      %p465 = scmp.lt.s32.totalorder %s462, 1
      %s466 = scalar_select %p465, %s462, 1
      %s467 = smul.addr %s464, 2
      %s468 = sadd.s32 %s466, %s467
      %s469 = smul.addr %s468, 8
      %s470 = scalar_lea.vmem %s9, %s469
      %s471 = smul.u32 2, %s27
      %s472 = smul.u32 2, %s27
      %p473 = scmp.lt.s32.totalorder %s26, 1
      %s474 = scalar_select %p473, %s26, 1
      %p475 = scmp.lt.s32.totalorder %s472, 1
      %s476 = scalar_select %p475, %s472, 1
      %s477 = smul.addr %s474, 2
      %s478 = sadd.s32 %s476, %s477
      %s479 = smul.addr %s478, 4
      %s480 = scalar_lea.vmem %s10, %s479
      %s481 = smul.u32 2, %s27
      %v483 = vld [vmem:[%s440] sm:$0xf]
      %v484 = vld [vmem:[%s440 + $0x4] sm:$0xf]
      %v485 = vld [vmem:[%s440 + $0x8] sm:$0xf]
      %v486 = vld [vmem:[%s440 + $0xc] sm:$0xf]
      %v487 = vld [vmem:[%s440 + $0x10] sm:$0xf]
      %v488 = vld [vmem:[%s440 + $0x14] sm:$0xf]
      %v489 = vld [vmem:[%s440 + $0x18] sm:$0xf]
      %v490 = vld [vmem:[%s440 + $0x1c] sm:$0xf]
      %v491 = vunpack.c.l.bf16 %v483
      %v492 = vunpack.c.l.bf16 %v484
      %v493 = vunpack.c.l.bf16 %v485
      %v494 = vunpack.c.l.bf16 %v486
      %v495 = vunpack.c.l.bf16 %v487
      %v496 = vunpack.c.l.bf16 %v488
      %v497 = vunpack.c.l.bf16 %v489
      %v498 = vunpack.c.l.bf16 %v490
      %vm499 = vcmask 130048
      %v500 = vsel %vm499, %v491, -inf
      %v501 = vsel %vm499, %v493, -inf
      %v502 = vsel %vm499, %v495, -inf
      %v503 = vmax.f32 %v500, %v502
      %v504 = vsel %vm499, %v497, -inf
      %v505 = vmax.f32 %v501, %v504
      %v506 = vmax.f32 %v503, %v505
      %v507 = vsel %vm499, %v492, -inf
      %v508 = vsel %vm499, %v494, -inf
      %v509 = vsel %vm499, %v496, -inf
      %v510 = vmax.f32 %v507, %v509
      %v511 = vsel %vm499, %v498, -inf
      %v512 = vmax.f32 %v508, %v511
      %v513 = vmax.f32 %v510, %v512
      %v514 = vpack.c.bf16 %v506, %v506
      %v515 = vpack.c.bf16 %v513, %v513
      %v516 = vunpack.c.l.bf16 %v514
      %v517 = vunpack.c.l.bf16 %v515
      %518 = vst.msk [vmem:[%s460] sm:$0xff] %vm499, %v516
      %519 = vst.msk [vmem:[%s460 + $0x8] sm:$0xff] %vm499, %v517
      %v520 = vld [vmem:[%s2] sm:$0xf]
      %v521 = vld [vmem:[%s2 + $0x4] sm:$0xf]
      %v522 = vld [vmem:[%s3] sm:$0x1]
      %v524 = vperm.slane %v522, 0
      %v528 = vunpack.c.l.b16 %v514
      %v529 = vunpack.c.l.b16 %v515
      %v530 = vpack.c.b16 %v529, %v528
      %v533 = vunpack.c.l.b16 %v520
      %v534 = vunpack.c.l.b16 %v521
      %v535 = vpack.c.b16 %v534, %v533
      %v538 = vsel %vm499, %v530, 0
      %540 = vmatpush.bf16.msra.mxu0 0
      %541 = vmatpush.bf16.msra.mxu0 0
      %542 = vmatpush.bf16.msra.mxu0 0
      %543 = vmatpush.bf16.msra.mxu0 0
      %544 = vmatpush.bf16.msra.mxu0 0
      %545 = vmatpush.bf16.msra.mxu0 0
      %546 = vmatpush.bf16.msra.mxu0 0
      %547 = vmatpush.bf16.msra.mxu0 %v535
      %548 = vmatmul.bf16.gmra.mxu0 %v538
      %v549 = vpop.f32.mrf.mxu0
      %v550 = vadd.f32 %v524, %v549
      %v551 = vpop.f32.mrf.mxu0
      %v552 = vadd.f32 %v524, %v551
      %553 = vdwg.mxu0
      %v554 = vpack.c.bf16 %v552, %v550
      %v555 = vld [vmem:[%s4] sm:$0xf]
      %v556 = vld [vmem:[%s4 + $0x4] sm:$0xf]
      %v557 = vld [vmem:[%s5] sm:$0x1]
      %v559 = vperm.slane %v557, 0
      %v563 = vunpack.c.l.b16 %v555
      %v564 = vunpack.c.l.b16 %v556
      %v565 = vpack.c.b16 %v564, %v563
      %v568 = vsel %vm499, %v554, 0
      %570 = vmatpush.bf16.msra.mxu0 0
      %571 = vmatpush.bf16.msra.mxu0 0
      %572 = vmatpush.bf16.msra.mxu0 0
      %573 = vmatpush.bf16.msra.mxu0 0
      %574 = vmatpush.bf16.msra.mxu0 0
      %575 = vmatpush.bf16.msra.mxu0 0
      %576 = vmatpush.bf16.msra.mxu0 0
      %577 = vmatpush.bf16.msra.mxu0 %v565
      %578 = vmatmul.bf16.gmra.mxu0 %v568
      %v579 = vpop.f32.mrf.mxu0
      %v580 = vadd.f32 %v559, %v579
      %v581 = vpop.f32.mrf.mxu0
      %v582 = vadd.f32 %v559, %v581
      %583 = vdwg.mxu0
      %v584 = vld [vmem:[%s450] sm:$0xf]
      %v585 = vld [vmem:[%s450 + $0x4] sm:$0xf]
      %v586 = vld [vmem:[%s6] sm:$0xf]
      %v587 = vld [vmem:[%s6 + $0x4] sm:$0xf]
      %v590 = vunpack.c.l.b16 %v584
      %v591 = vunpack.c.l.b16 %v585
      %v592 = vpack.c.b16 %v591, %v590
      %v595 = vunpack.c.l.b16 %v586
      %v596 = vunpack.c.l.b16 %v587
      %v597 = vpack.c.b16 %v596, %v595
      %v600 = vsel %vm499, %v592, 0
      %602 = vmatpush.bf16.msra.mxu0 0
      %603 = vmatpush.bf16.msra.mxu0 0
      %604 = vmatpush.bf16.msra.mxu0 0
      %605 = vmatpush.bf16.msra.mxu0 0
      %606 = vmatpush.bf16.msra.mxu0 0
      %607 = vmatpush.bf16.msra.mxu0 0
      %608 = vmatpush.bf16.msra.mxu0 0
      %609 = vmatpush.bf16.msra.mxu0 %v597
      %610 = vmatmul.bf16.gmra.mxu0 %v600
      %v611 = vpop.f32.mrf.mxu0
      %v612 = vadd.f32 0.0, %v611
      %v613 = vpop.f32.mrf.mxu0
      %v614 = vadd.f32 0.0, %v613
      %615 = vdwg.mxu0
      %v616 = vld [vmem:[%s7] sm:$0x1]
      %v618 = vperm.slane %v616, 0
      %v620 = vadd.f32 %v612, %v618
      %v621 = vadd.f32 %v614, %v618
      %624 = vrot.lane.b32.xlu0 %v620, 16
      %v625 = vpop.permute.xlu0 %624
      %626 = vrot.lane.b32.xlu0 %v621, 16
      %v627 = vpop.permute.xlu0 %626
      %v630 = vsel %vm499, %v580, %v625
      %v631 = vsel %vm499, %v582, %v627
      %vm632 = vcmask 261120
      %633 = vst.msk [vmem:[%s470] sm:$0xff] %vm632, %v630
      %634 = vst.msk [vmem:[%s470 + $0x8] sm:$0xff] %vm632, %v631
      %637 = vrot.lane.b32.xlu0 %v580, 112
      %v638 = vpop.permute.xlu0 %637
      %639 = vrot.lane.b32.xlu0 %v582, 112
      %v640 = vpop.permute.xlu0 %639
      %645 = vrot.lane.b32.xlu0 %v612, 32
      %v646 = vpop.permute.xlu0 %645
      %647 = vrot.lane.b32.xlu0 %v614, 32
      %v648 = vpop.permute.xlu0 %647
      %v651 = vsel %vm632, %v638, %v646
      %v652 = vsel %vm632, %v640, %v648
      %v653 = vpack.c.bf16 %v651, %v651
      %v654 = vpack.c.bf16 %v652, %v652
      %vm655 = vcmask 388096
      %656 = vst.msk [vmem:[%s480] sm:$0xf] %vm655, %v653
      %657 = vst.msk [vmem:[%s480 + $0x4] sm:$0xf] %vm655, %v654
      %s658 = smul.u32 2, %s27
      %p659 = scmp.lt.s32.totalorder %s26, 1
      %s660 = scalar_select %p659, %s26, 1
      %p661 = scmp.lt.s32.totalorder %s658, 1
      %s662 = scalar_select %p661, %s658, 1
      %s663 = smul.addr %s660, 2
      %s664 = sadd.s32 %s662, %s663
      %s665 = smul.addr %s664, 8
      %s666 = scalar_lea.vmem %s8, %s665
      %s667 = smul.u32 2, %s27
      %p668 = scmp.lt.s32.totalorder %s26, 1
      %s669 = scalar_select %p668, %s26, 1
      %p670 = scmp.lt.s32.totalorder %s667, 1
      %s671 = scalar_select %p670, %s667, 1
      %s672 = smul.addr %s669, 2
      %s673 = sadd.s32 %s671, %s672
      %s674 = smul.addr %s673, 8
      %s675 = scalar_lea.vmem %s9, %s674
      %s676 = smul.u32 2, %s27
      %p677 = scmp.lt.s32.totalorder %s26, 1
      %s678 = scalar_select %p677, %s26, 1
      %p679 = scmp.lt.s32.totalorder %s676, 1
      %s680 = scalar_select %p679, %s676, 1
      %s681 = smul.addr %s678, 2
      %s682 = sadd.s32 %s680, %s681
      %s683 = smul.addr %s682, 4
      %s684 = scalar_lea.vmem %s10, %s683
      // Predicated region
      $region53: #{tdpt_forward.4} parent=51 // pred_check
        %p685 = pneg %p236
      $region54: #{tdpt_forward.4} parent=51 // pred_check_branch
        %687 = sbr.rel (%p685) target = $region56
      $region55: #{tdpt_forward.4} parent=51 // pred_region
        %s688 = smul.u32 2, %s27
      $region56: #{tdpt_forward.4} parent=51 // pred_fallthru
        _
      // Predicated region
      $region57: #{tdpt_forward.4} parent=51 // pred_check
        %p689 = pneg %p264
      $region58: #{tdpt_forward.4} parent=51 // pred_check_branch
        %691 = sbr.rel (%p689) target = $region60
      $region59: #{tdpt_forward.4} parent=51 // pred_region
        %s692 = smul.u32 2, %s27
      $region60: #{tdpt_forward.4} parent=51 // pred_fallthru
        _
      // Predicated region
      $region61: #{tdpt_forward.4} parent=51 // pred_check
        %p693 = pneg %p292
      $region62: #{tdpt_forward.4} parent=51 // pred_check_branch
        %695 = sbr.rel (%p693) target = $region64
      $region63: #{tdpt_forward.4} parent=51 // pred_region
        %s696 = smul.u32 2, %s27
      $region64: #{tdpt_forward.4} parent=51 // pred_fallthru
        _
    $region52: #{tdpt_forward.4} parent=5 // pred_fallthru
      _
    %p697 = scmp.le.s32.totalorder 2, %s17
    // Predicated region
    $region65: #{tdpt_forward.4} parent=5 // pred_check
      %p698 = pneg %p697
    $region66: #{tdpt_forward.4} parent=5 // pred_check_branch
      %700 = sbr.rel (%p698) target = $region68
    $region67: #{tdpt_forward.4} parent=5 // pred_region
      %s701 = ssub.s32 %s17, 2
      // Predicated region
      $region69: #{tdpt_forward.4} parent=67 // pred_check
        %p702 = pneg %p242
      $region70: #{tdpt_forward.4} parent=67 // pred_check_branch
        %704 = sbr.rel (%p702) target = $region72
      $region71: #{tdpt_forward.4} parent=67 // pred_region
        %s705 = smul.u32 2, %s29
        %p706 = scmp.lt.s32.totalorder %s28, 1
        %s707 = scalar_select %p706, %s28, 1
        %p708 = scmp.lt.s32.totalorder %s705, 1
        %s709 = scalar_select %p708, %s705, 1
        %s710 = smul.addr %s707, 2
        %s711 = sadd.s32 %s709, %s710
        %s712 = smul.addr %s711, 8
        %s713 = scalar_lea.vmem %s8, %s712
      $region72: #{tdpt_forward.4} parent=67 // pred_fallthru
        _
      // Predicated region
      $region73: #{tdpt_forward.4} parent=67 // pred_check
        %p714 = pneg %p270
      $region74: #{tdpt_forward.4} parent=67 // pred_check_branch
        %716 = sbr.rel (%p714) target = $region76
      $region75: #{tdpt_forward.4} parent=67 // pred_region
        %s717 = smul.u32 2, %s29
        %p718 = scmp.lt.s32.totalorder %s28, 1
        %s719 = scalar_select %p718, %s28, 1
        %p720 = scmp.lt.s32.totalorder %s717, 1
        %s721 = scalar_select %p720, %s717, 1
        %s722 = smul.addr %s719, 2
        %s723 = sadd.s32 %s721, %s722
        %s724 = smul.addr %s723, 8
        %s725 = scalar_lea.vmem %s9, %s724
      $region76: #{tdpt_forward.4} parent=67 // pred_fallthru
        _
      // Predicated region
      $region77: #{tdpt_forward.4} parent=67 // pred_check
        %p726 = pneg %p298
      $region78: #{tdpt_forward.4} parent=67 // pred_check_branch
        %728 = sbr.rel (%p726) target = $region80
      $region79: #{tdpt_forward.4} parent=67 // pred_region
        %s729 = smul.u32 2, %s29
        %p730 = scmp.lt.s32.totalorder %s28, 1
        %s731 = scalar_select %p730, %s28, 1
        %p732 = scmp.lt.s32.totalorder %s729, 1
        %s733 = scalar_select %p732, %s729, 1
        %s734 = smul.addr %s731, 2
        %s735 = sadd.s32 %s733, %s734
        %s736 = smul.addr %s735, 4
        %s737 = scalar_lea.vmem %s10, %s736
      $region80: #{tdpt_forward.4} parent=67 // pred_fallthru
        _
    $region68: #{tdpt_forward.4} parent=5 // pred_fallthru
      _
  $region6: #{tdpt_forward.4} parent=0 // loop_footer
    %s21 = sadd.s32 1, %s17
  $region7: #{tdpt_forward.4} parent=0 // loop_footer_branch
    %16 = sbr.rel target = $region3
  $region8: #{tdpt_forward.4} parent=0 // loop_exit
    _

// kernel: tdpt_forward.5
$region0: #{tdpt_forward.5}
  #allocation0 [shape = 'u32[]', space=smem, size = 0x4, offset = 0x4, fixed_abs, tag = 'smem constant byte address 0x4 - core index']
  #allocation1 [shape = 'u32[72,128]{1,0:T(1,128)}', space=vmem, size = 0x9000, scoped, tag = 'internal scratch']
  %s0 = inlined_call_operand.vmem [shape: f32[2,16,16], index: 0, kind: input, shape index: {}]
  %s1 = inlined_call_operand.vmem [shape: f32[2,16,32], index: 1, kind: input, shape index: {}]
  %s2 = inlined_call_operand.vmem [shape: bf16[2,4,16,48], index: 2, kind: input, shape index: {}]
  %s3 = inlined_call_operand.vmem [shape: bf16[16,16], index: 3, kind: input, shape index: {}]
  %s4 = inlined_call_operand.vmem [shape: f32[1,16], index: 4, kind: input, shape index: {}]
  %s5 = inlined_call_operand.vmem [shape: bf16[16,16], index: 5, kind: input, shape index: {}]
  %s6 = inlined_call_operand.vmem [shape: f32[1,16], index: 6, kind: input, shape index: {}]
  %s7 = inlined_call_operand.vmem [shape: bf16[16,16], index: 7, kind: input, shape index: {}]
  %s8 = inlined_call_operand.vmem [shape: f32[1,16], index: 8, kind: input, shape index: {}]
  %s9 = inlined_call_operand.vmem [shape: bf16[16,16], index: 9, kind: input, shape index: {}]
  %s10 = inlined_call_operand.vmem [shape: f32[1,16], index: 10, kind: input, shape index: {}]
  %s11 = inlined_call_operand.vmem [shape: f32[2,16,16], index: 11, kind: output, shape index: {}]
  %s12 = sld [smem:[#allocation0]]
  $region77: #{tdpt_forward.5} parent=0
    _
  %s14 = ssub.s32 1, %s12
  %s15 = scalar_select 0, %s14, %s12
  loop: start=0, step=1, limit=4
  $region2: #{tdpt_forward.5} parent=0 // loop_pre_header
    _
  $region3: #{tdpt_forward.5} parent=0 // loop_header
    %s17 = sphi 0, %s21
    %p18 = scmp.ge.s32.totalorder %s17, 4
    %s24 = sphi 0, %s36
    %s25 = sphi 0, %s32
    %s26 = sphi 0, %s24
    %s27 = sphi 0, %s25
    %s28 = sphi 0, %s26
    %s29 = sphi 0, %s27
    %s41 = sphi 0, %s43
    %s44 = sphi 0, %s41
    %s45 = sphi 0, %s44
    %s61 = sphi 0, %s45
    %s69 = sphi 0, %s71
    %s72 = sphi 0, %s69
    %s73 = sphi 0, %s72
    %s89 = sphi 0, %s73
    %s97 = sphi 0, %s99
    %s100 = sphi 0, %s97
    %s101 = sphi 0, %s100
    %s117 = sphi 0, %s101
    %s121 = sphi 0, %s121
    %s123 = sphi 0, %s121
    %s124 = sphi 0, %s123
    %s138 = sphi 0, %s124
    %s142 = sphi 0, %s142
    %s144 = sphi 0, %s142
    %s145 = sphi 0, %s144
    %s159 = sphi 0, %s145
    %s163 = sphi 0, %s163
    %s165 = sphi 0, %s163
    %s166 = sphi 0, %s165
    %s180 = sphi 0, %s166
    %s184 = sphi 0, %s184
    %s186 = sphi 0, %s184
    %s187 = sphi 0, %s186
    %s201 = sphi 0, %s187
    %s205 = sphi 0, %s205
    %s207 = sphi 0, %s205
    %s208 = sphi 0, %s207
    %s222 = sphi 0, %s208
    %s226 = sphi 0, %s226
    %s228 = sphi 0, %s226
    %s229 = sphi 0, %s228
    %s243 = sphi 0, %s229
    %s247 = sphi 0, %s247
    %s249 = sphi 0, %s247
    %s250 = sphi 0, %s249
    %s264 = sphi 0, %s250
    %s268 = sphi 0, %s268
    %s270 = sphi 0, %s268
    %s271 = sphi 0, %s270
    %s285 = sphi 0, %s271
    %s293 = sphi 0, %s295
    %s296 = sphi 0, %s293
    %s297 = sphi 0, %s296
    %s313 = sphi 0, %s297
  $region4: #{tdpt_forward.5} parent=0 // loop_header_branch
    %20 = sbr.rel (%p18) target = $region8
  $region5: #{tdpt_forward.5} parent=0 // loop_body
    %s22 = ssub.s32 %s17, 1
    %s23 = ssub.s32 %s17, 2
    %s30 = sadd.s32 1, %s25
    %p31 = scmp.ge.s32.totalorder %s30, 1
    %s32 = scalar_select %p31, 0, %s30
    %s33 = sadd.s32 1, %s24
    %s34 = scalar_select %p31, %s33, %s24
    %p35 = scmp.ge.s32.totalorder %s34, 2
    %s36 = scalar_select %p35, 0, %s34
    %s37 = ssub.s32 %s24, %s36
    %s38 = ssub.s32 %s25, %s32
    %s39 = sor.u32 %s37, %s38
    %p40 = scmp.eq.s32.totalorder %s39, 0
    %s42 = sadd.s32 %s41, 1
    %s43 = scalar_select %p40, %s41, %s42
    %p46 = pneg %p40
    %p47 = scmp.eq.s32.totalorder %s17, 1
    %p48 = por %p46, %p47
    %p49 = scmp.ne.s32.totalorder %s41, %s44
    %p50 = scmp.eq.s32.totalorder %s17, 0
    %p51 = por %p49, %p50
    %p52 = scmp.ne.s32.totalorder %s41, %s44
    %p53 = scmp.eq.s32.totalorder %s22, 1
    %p54 = por %p52, %p53
    %p55 = scmp.ne.s32.totalorder %s44, %s45
    %p56 = scmp.eq.s32.totalorder %s22, 0
    %p57 = por %p55, %p56
    %p58 = scmp.ne.s32.totalorder %s44, %s45
    %p59 = scmp.eq.s32.totalorder %s23, 1
    %p60 = por %p58, %p59
    %p62 = scmp.ne.s32.totalorder %s45, %s61
    %p63 = scmp.eq.s32.totalorder %s23, 0
    %p64 = por %p62, %p63
    %s65 = ssub.s32 %s24, %s36
    %s66 = ssub.s32 %s25, %s32
    %s67 = sor.u32 %s65, %s66
    %p68 = scmp.eq.s32.totalorder %s67, 0
    %s70 = sadd.s32 %s69, 1
    %s71 = scalar_select %p68, %s69, %s70
    %p74 = pneg %p68
    %p75 = scmp.eq.s32.totalorder %s17, 1
    %p76 = por %p74, %p75
    %p77 = scmp.ne.s32.totalorder %s69, %s72
    %p78 = scmp.eq.s32.totalorder %s17, 0
    %p79 = por %p77, %p78
    %p80 = scmp.ne.s32.totalorder %s69, %s72
    %p81 = scmp.eq.s32.totalorder %s22, 1
    %p82 = por %p80, %p81
    %p83 = scmp.ne.s32.totalorder %s72, %s73
    %p84 = scmp.eq.s32.totalorder %s22, 0
    %p85 = por %p83, %p84
    %p86 = scmp.ne.s32.totalorder %s72, %s73
    %p87 = scmp.eq.s32.totalorder %s23, 1
    %p88 = por %p86, %p87
    %p90 = scmp.ne.s32.totalorder %s73, %s89
    %p91 = scmp.eq.s32.totalorder %s23, 0
    %p92 = por %p90, %p91
    %s93 = ssub.s32 %s24, %s36
    %s94 = ssub.s32 %s25, %s32
    %s95 = sor.u32 %s93, %s94
    %p96 = scmp.eq.s32.totalorder %s95, 0
    %s98 = sadd.s32 %s97, 1
    %s99 = scalar_select %p96, %s97, %s98
    %p102 = pneg %p96
    %p103 = scmp.eq.s32.totalorder %s17, 1
    %p104 = por %p102, %p103
    %p105 = scmp.ne.s32.totalorder %s97, %s100
    %p106 = scmp.eq.s32.totalorder %s17, 0
    %p107 = por %p105, %p106
    %p108 = scmp.ne.s32.totalorder %s97, %s100
    %p109 = scmp.eq.s32.totalorder %s22, 1
    %p110 = por %p108, %p109
    %p111 = scmp.ne.s32.totalorder %s100, %s101
    %p112 = scmp.eq.s32.totalorder %s22, 0
    %p113 = por %p111, %p112
    %p114 = scmp.ne.s32.totalorder %s100, %s101
    %p115 = scmp.eq.s32.totalorder %s23, 1
    %p116 = por %p114, %p115
    %p118 = scmp.ne.s32.totalorder %s101, %s117
    %p119 = scmp.eq.s32.totalorder %s23, 0
    %p120 = por %p118, %p119
    %s122 = sadd.s32 %s121, 1
    %p125 = scmp.eq.s32.totalorder %s17, 1
    %p126 = scmp.ne.s32.totalorder %s121, %s123
    %p127 = scmp.eq.s32.totalorder %s17, 0
    %p128 = por %p126, %p127
    %p129 = scmp.ne.s32.totalorder %s121, %s123
    %p130 = scmp.eq.s32.totalorder %s22, 1
    %p131 = por %p129, %p130
    %p132 = scmp.ne.s32.totalorder %s123, %s124
    %p133 = scmp.eq.s32.totalorder %s22, 0
    %p134 = por %p132, %p133
    %p135 = scmp.ne.s32.totalorder %s123, %s124
    %p136 = scmp.eq.s32.totalorder %s23, 1
    %p137 = por %p135, %p136
    %p139 = scmp.ne.s32.totalorder %s124, %s138
    %p140 = scmp.eq.s32.totalorder %s23, 0
    %p141 = por %p139, %p140
    %s143 = sadd.s32 %s142, 1
    %p146 = scmp.eq.s32.totalorder %s17, 1
    %p147 = scmp.ne.s32.totalorder %s142, %s144
    %p148 = scmp.eq.s32.totalorder %s17, 0
    %p149 = por %p147, %p148
    %p150 = scmp.ne.s32.totalorder %s142, %s144
    %p151 = scmp.eq.s32.totalorder %s22, 1
    %p152 = por %p150, %p151
    %p153 = scmp.ne.s32.totalorder %s144, %s145
    %p154 = scmp.eq.s32.totalorder %s22, 0
    %p155 = por %p153, %p154
    %p156 = scmp.ne.s32.totalorder %s144, %s145
    %p157 = scmp.eq.s32.totalorder %s23, 1
    %p158 = por %p156, %p157
    %p160 = scmp.ne.s32.totalorder %s145, %s159
    %p161 = scmp.eq.s32.totalorder %s23, 0
    %p162 = por %p160, %p161
    %s164 = sadd.s32 %s163, 1
    %p167 = scmp.eq.s32.totalorder %s17, 1
    %p168 = scmp.ne.s32.totalorder %s163, %s165
    %p169 = scmp.eq.s32.totalorder %s17, 0
    %p170 = por %p168, %p169
    %p171 = scmp.ne.s32.totalorder %s163, %s165
    %p172 = scmp.eq.s32.totalorder %s22, 1
    %p173 = por %p171, %p172
    %p174 = scmp.ne.s32.totalorder %s165, %s166
    %p175 = scmp.eq.s32.totalorder %s22, 0
    %p176 = por %p174, %p175
    %p177 = scmp.ne.s32.totalorder %s165, %s166
    %p178 = scmp.eq.s32.totalorder %s23, 1
    %p179 = por %p177, %p178
    %p181 = scmp.ne.s32.totalorder %s166, %s180
    %p182 = scmp.eq.s32.totalorder %s23, 0
    %p183 = por %p181, %p182
    %s185 = sadd.s32 %s184, 1
    %p188 = scmp.eq.s32.totalorder %s17, 1
    %p189 = scmp.ne.s32.totalorder %s184, %s186
    %p190 = scmp.eq.s32.totalorder %s17, 0
    %p191 = por %p189, %p190
    %p192 = scmp.ne.s32.totalorder %s184, %s186
    %p193 = scmp.eq.s32.totalorder %s22, 1
    %p194 = por %p192, %p193
    %p195 = scmp.ne.s32.totalorder %s186, %s187
    %p196 = scmp.eq.s32.totalorder %s22, 0
    %p197 = por %p195, %p196
    %p198 = scmp.ne.s32.totalorder %s186, %s187
    %p199 = scmp.eq.s32.totalorder %s23, 1
    %p200 = por %p198, %p199
    %p202 = scmp.ne.s32.totalorder %s187, %s201
    %p203 = scmp.eq.s32.totalorder %s23, 0
    %p204 = por %p202, %p203
    %s206 = sadd.s32 %s205, 1
    %p209 = scmp.eq.s32.totalorder %s17, 1
    %p210 = scmp.ne.s32.totalorder %s205, %s207
    %p211 = scmp.eq.s32.totalorder %s17, 0
    %p212 = por %p210, %p211
    %p213 = scmp.ne.s32.totalorder %s205, %s207
    %p214 = scmp.eq.s32.totalorder %s22, 1
    %p215 = por %p213, %p214
    %p216 = scmp.ne.s32.totalorder %s207, %s208
    %p217 = scmp.eq.s32.totalorder %s22, 0
    %p218 = por %p216, %p217
    %p219 = scmp.ne.s32.totalorder %s207, %s208
    %p220 = scmp.eq.s32.totalorder %s23, 1
    %p221 = por %p219, %p220
    %p223 = scmp.ne.s32.totalorder %s208, %s222
    %p224 = scmp.eq.s32.totalorder %s23, 0
    %p225 = por %p223, %p224
    %s227 = sadd.s32 %s226, 1
    %p230 = scmp.eq.s32.totalorder %s17, 1
    %p231 = scmp.ne.s32.totalorder %s226, %s228
    %p232 = scmp.eq.s32.totalorder %s17, 0
    %p233 = por %p231, %p232
    %p234 = scmp.ne.s32.totalorder %s226, %s228
    %p235 = scmp.eq.s32.totalorder %s22, 1
    %p236 = por %p234, %p235
    %p237 = scmp.ne.s32.totalorder %s228, %s229
    %p238 = scmp.eq.s32.totalorder %s22, 0
    %p239 = por %p237, %p238
    %p240 = scmp.ne.s32.totalorder %s228, %s229
    %p241 = scmp.eq.s32.totalorder %s23, 1
    %p242 = por %p240, %p241
    %p244 = scmp.ne.s32.totalorder %s229, %s243
    %p245 = scmp.eq.s32.totalorder %s23, 0
    %p246 = por %p244, %p245
    %s248 = sadd.s32 %s247, 1
    %p251 = scmp.eq.s32.totalorder %s17, 1
    %p252 = scmp.ne.s32.totalorder %s247, %s249
    %p253 = scmp.eq.s32.totalorder %s17, 0
    %p254 = por %p252, %p253
    %p255 = scmp.ne.s32.totalorder %s247, %s249
    %p256 = scmp.eq.s32.totalorder %s22, 1
    %p257 = por %p255, %p256
    %p258 = scmp.ne.s32.totalorder %s249, %s250
    %p259 = scmp.eq.s32.totalorder %s22, 0
    %p260 = por %p258, %p259
    %p261 = scmp.ne.s32.totalorder %s249, %s250
    %p262 = scmp.eq.s32.totalorder %s23, 1
    %p263 = por %p261, %p262
    %p265 = scmp.ne.s32.totalorder %s250, %s264
    %p266 = scmp.eq.s32.totalorder %s23, 0
    %p267 = por %p265, %p266
    %s269 = sadd.s32 %s268, 1
    %p272 = scmp.eq.s32.totalorder %s17, 1
    %p273 = scmp.ne.s32.totalorder %s268, %s270
    %p274 = scmp.eq.s32.totalorder %s17, 0
    %p275 = por %p273, %p274
    %p276 = scmp.ne.s32.totalorder %s268, %s270
    %p277 = scmp.eq.s32.totalorder %s22, 1
    %p278 = por %p276, %p277
    %p279 = scmp.ne.s32.totalorder %s270, %s271
    %p280 = scmp.eq.s32.totalorder %s22, 0
    %p281 = por %p279, %p280
    %p282 = scmp.ne.s32.totalorder %s270, %s271
    %p283 = scmp.eq.s32.totalorder %s23, 1
    %p284 = por %p282, %p283
    %p286 = scmp.ne.s32.totalorder %s271, %s285
    %p287 = scmp.eq.s32.totalorder %s23, 0
    %p288 = por %p286, %p287
    %s289 = ssub.s32 %s24, %s36
    %s290 = ssub.s32 %s25, %s32
    %s291 = sor.u32 %s289, %s290
    %p292 = scmp.eq.s32.totalorder %s291, 0
    %s294 = sadd.s32 %s293, 1
    %s295 = scalar_select %p292, %s293, %s294
    %p298 = pneg %p292
    %p299 = scmp.eq.s32.totalorder %s17, 1
    %p300 = por %p298, %p299
    %p301 = scmp.ne.s32.totalorder %s293, %s296
    %p302 = scmp.eq.s32.totalorder %s17, 0
    %p303 = por %p301, %p302
    %p304 = scmp.ne.s32.totalorder %s293, %s296
    %p305 = scmp.eq.s32.totalorder %s22, 1
    %p306 = por %p304, %p305
    %p307 = scmp.ne.s32.totalorder %s296, %s297
    %p308 = scmp.eq.s32.totalorder %s22, 0
    %p309 = por %p307, %p308
    %p310 = scmp.ne.s32.totalorder %s296, %s297
    %p311 = scmp.eq.s32.totalorder %s23, 1
    %p312 = por %p310, %p311
    %p314 = scmp.ne.s32.totalorder %s297, %s313
    %p315 = scmp.eq.s32.totalorder %s23, 0
    %p316 = por %p314, %p315
    %p317 = scmp.le.s32.totalorder 1, %s17
    %p318 = scmp.lt.s32.totalorder %s17, 3
    %p319 = pnand %p317, %p318
    %p320 = pneg %p319
    // Predicated region
    $region9: #{tdpt_forward.5} parent=5 // pred_check
      _
    $region10: #{tdpt_forward.5} parent=5 // pred_check_branch
      %322 = sbr.rel (%p319) target = $region12
    $region11: #{tdpt_forward.5} parent=5 // pred_region
      %s323 = ssub.s32 %s17, 1
      // Predicated region
      $region13: #{tdpt_forward.5} parent=11 // pred_check
        %p324 = pneg %p134
      $region14: #{tdpt_forward.5} parent=11 // pred_check_branch
        %326 = sbr.rel (%p324) target = $region16
      $region15: #{tdpt_forward.5} parent=11 // pred_region
        _
      $region16: #{tdpt_forward.5} parent=11 // pred_fallthru
        _
      // Predicated region
      $region17: #{tdpt_forward.5} parent=11 // pred_check
        %p327 = pneg %p155
      $region18: #{tdpt_forward.5} parent=11 // pred_check_branch
        %329 = sbr.rel (%p327) target = $region20
      $region19: #{tdpt_forward.5} parent=11 // pred_region
        _
      $region20: #{tdpt_forward.5} parent=11 // pred_fallthru
        _
      // Predicated region
      $region21: #{tdpt_forward.5} parent=11 // pred_check
        %p330 = pneg %p176
      $region22: #{tdpt_forward.5} parent=11 // pred_check_branch
        %332 = sbr.rel (%p330) target = $region24
      $region23: #{tdpt_forward.5} parent=11 // pred_region
        _
      $region24: #{tdpt_forward.5} parent=11 // pred_fallthru
        _
      // Predicated region
      $region25: #{tdpt_forward.5} parent=11 // pred_check
        %p333 = pneg %p197
      $region26: #{tdpt_forward.5} parent=11 // pred_check_branch
        %335 = sbr.rel (%p333) target = $region28
      $region27: #{tdpt_forward.5} parent=11 // pred_region
        _
      $region28: #{tdpt_forward.5} parent=11 // pred_fallthru
        _
      // Predicated region
      $region29: #{tdpt_forward.5} parent=11 // pred_check
        %p336 = pneg %p218
      $region30: #{tdpt_forward.5} parent=11 // pred_check_branch
        %338 = sbr.rel (%p336) target = $region32
      $region31: #{tdpt_forward.5} parent=11 // pred_region
        _
      $region32: #{tdpt_forward.5} parent=11 // pred_fallthru
        _
      // Predicated region
      $region33: #{tdpt_forward.5} parent=11 // pred_check
        %p339 = pneg %p239
      $region34: #{tdpt_forward.5} parent=11 // pred_check_branch
        %341 = sbr.rel (%p339) target = $region36
      $region35: #{tdpt_forward.5} parent=11 // pred_region
        _
      $region36: #{tdpt_forward.5} parent=11 // pred_fallthru
        _
      // Predicated region
      $region37: #{tdpt_forward.5} parent=11 // pred_check
        %p342 = pneg %p260
      $region38: #{tdpt_forward.5} parent=11 // pred_check_branch
        %344 = sbr.rel (%p342) target = $region40
      $region39: #{tdpt_forward.5} parent=11 // pred_region
        _
      $region40: #{tdpt_forward.5} parent=11 // pred_fallthru
        _
      // Predicated region
      $region41: #{tdpt_forward.5} parent=11 // pred_check
        %p345 = pneg %p281
      $region42: #{tdpt_forward.5} parent=11 // pred_check_branch
        %347 = sbr.rel (%p345) target = $region44
      $region43: #{tdpt_forward.5} parent=11 // pred_region
        _
      $region44: #{tdpt_forward.5} parent=11 // pred_fallthru
        _
    $region12: #{tdpt_forward.5} parent=5 // pred_fallthru
      _
    %p348 = scmp.lt.s32.totalorder %s17, 2
    // Predicated region
    $region45: #{tdpt_forward.5} parent=5 // pred_check
      %p349 = pneg %p348
    $region46: #{tdpt_forward.5} parent=5 // pred_check_branch
      %351 = sbr.rel (%p349) target = $region48
    $region47: #{tdpt_forward.5} parent=5 // pred_region
      // Predicated region
      $region49: #{tdpt_forward.5} parent=47 // pred_check
        %p352 = pneg %p51
      $region50: #{tdpt_forward.5} parent=47 // pred_check_branch
        %354 = sbr.rel (%p352) target = $region52
      $region51: #{tdpt_forward.5} parent=47 // pred_region
        %s355 = smul.u32 2, %s25
        %p356 = scmp.lt.s32.totalorder %s24, 1
        %s357 = scalar_select %p356, %s24, 1
        %p358 = scmp.lt.s32.totalorder %s355, 1
        %s359 = scalar_select %p358, %s355, 1
        %s360 = smul.addr %s357, 2
        %s361 = sadd.s32 %s359, %s360
        %s362 = smul.addr %s361, 8
        %s363 = scalar_lea.vmem %s0, %s362
        %s364 = smul.u32 2, %s25
      $region52: #{tdpt_forward.5} parent=47 // pred_fallthru
        _
      // Predicated region
      $region53: #{tdpt_forward.5} parent=47 // pred_check
        %p365 = pneg %p79
      $region54: #{tdpt_forward.5} parent=47 // pred_check_branch
        %367 = sbr.rel (%p365) target = $region56
      $region55: #{tdpt_forward.5} parent=47 // pred_region
        %s368 = smul.u32 2, %s25
        %p369 = scmp.lt.s32.totalorder %s24, 1
        %s370 = scalar_select %p369, %s24, 1
        %p371 = scmp.lt.s32.totalorder %s368, 1
        %s372 = scalar_select %p371, %s368, 1
        %s373 = smul.addr %s370, 2
        %s374 = sadd.s32 %s372, %s373
        %s375 = smul.addr %s374, 8
        %s376 = scalar_lea.vmem %s1, %s375
        %s377 = smul.u32 2, %s25
      $region56: #{tdpt_forward.5} parent=47 // pred_fallthru
        _
      // Predicated region
      $region57: #{tdpt_forward.5} parent=47 // pred_check
        %p378 = pneg %p107
      $region58: #{tdpt_forward.5} parent=47 // pred_check_branch
        %380 = sbr.rel (%p378) target = $region60
      $region59: #{tdpt_forward.5} parent=47 // pred_region
        %s381 = smul.u32 2, %s25
        %p382 = scmp.lt.s32.totalorder %s24, 1
        %s383 = scalar_select %p382, %s24, 1
        %p384 = scmp.lt.s32.totalorder %s381, 1
        %s385 = scalar_select %p384, %s381, 1
        %s386 = smul.addr %s383, 8
        %s387 = sadd.s32 %s385, %s386
        %s388 = smul.addr %s387, 4
        %s389 = scalar_lea.vmem %s2, %s388
        %s390 = smul.u32 2, %s25
      $region60: #{tdpt_forward.5} parent=47 // pred_fallthru
        _
    $region48: #{tdpt_forward.5} parent=5 // pred_fallthru
      _
    %p391 = scmp.le.s32.totalorder 1, %s17
    %p392 = scmp.lt.s32.totalorder %s17, 3
    %p393 = pnand %p391, %p392
    %p394 = pneg %p393
    // Predicated region
    $region61: #{tdpt_forward.5} parent=5 // pred_check
      _
    $region62: #{tdpt_forward.5} parent=5 // pred_check_branch
      %396 = sbr.rel (%p393) target = $region64
    $region63: #{tdpt_forward.5} parent=5 // pred_region
      %s397 = ssub.s32 %s17, 1
      %s398 = smul.u32 2, %s27
      %p399 = scmp.lt.s32.totalorder %s26, 1
      %s400 = scalar_select %p399, %s26, 1
      %p401 = scmp.lt.s32.totalorder %s398, 1
      %s402 = scalar_select %p401, %s398, 1
      %s403 = smul.addr %s400, 2
      %s404 = sadd.s32 %s402, %s403
      %s405 = smul.addr %s404, 8
      %s406 = scalar_lea.vmem %s0, %s405
      %p407 = pneg %p57
      %p408 = pneg %p54
      %s409 = smul.u32 2, %s27
      %p410 = scmp.lt.s32.totalorder %s26, 1
      %s411 = scalar_select %p410, %s26, 1
      %p412 = scmp.lt.s32.totalorder %s409, 1
      %s413 = scalar_select %p412, %s409, 1
      %s414 = smul.addr %s411, 2
      %s415 = sadd.s32 %s413, %s414
      %s416 = smul.addr %s415, 8
      %s417 = scalar_lea.vmem %s1, %s416
      %p418 = pneg %p85
      %p419 = pneg %p82
      %s420 = smul.u32 2, %s27
      %p421 = scmp.lt.s32.totalorder %s26, 1
      %s422 = scalar_select %p421, %s26, 1
      %p423 = scmp.lt.s32.totalorder %s420, 1
      %s424 = scalar_select %p423, %s420, 1
      %s425 = smul.addr %s422, 8
      %s426 = sadd.s32 %s424, %s425
      %s427 = smul.addr %s426, 4
      %s428 = scalar_lea.vmem %s2, %s427
      %p429 = pneg %p113
      %p430 = pneg %p110
      %p431 = pneg %p134
      %p432 = pneg %p131
      %p433 = pneg %p155
      %p434 = pneg %p152
      %p435 = pneg %p176
      %p436 = pneg %p173
      %p437 = pneg %p197
      %p438 = pneg %p194
      %p439 = pneg %p218
      %p440 = pneg %p215
      %p441 = pneg %p239
      %p442 = pneg %p236
      %p443 = pneg %p260
      %p444 = pneg %p257
      %p445 = pneg %p281
      %p446 = pneg %p278
      %p447 = pneg %p309
      %p448 = pneg %p306
      %s449 = smul.u32 2, %s27
      %p450 = scmp.lt.s32.totalorder %s26, 1
      %s451 = scalar_select %p450, %s26, 1
      %p452 = scmp.lt.s32.totalorder %s449, 1
      %s453 = scalar_select %p452, %s449, 1
      %s454 = smul.addr %s451, 2
      %s455 = sadd.s32 %s453, %s454
      %s456 = smul.addr %s455, 8
      %s457 = scalar_lea.vmem %s11, %s456
      %s458 = smul.u32 2, %s27
      %p459 = scmp.lt.s32.totalorder %s26, 1
      %s460 = scalar_select %p459, %s26, 1
      %p461 = scmp.lt.s32.totalorder %s458, 1
      %s462 = scalar_select %p461, %s458, 1
      %s463 = smul.addr %s460, 2
      %s464 = sadd.s32 %s462, %s463
      %s465 = smul.addr %s464, 8
      %s466 = scalar_lea.vmem %s0, %s465
      %s467 = smul.u32 2, %s27
      %s468 = smul.u32 2, %s27
      %p469 = scmp.lt.s32.totalorder %s26, 1
      %s470 = scalar_select %p469, %s26, 1
      %p471 = scmp.lt.s32.totalorder %s468, 1
      %s472 = scalar_select %p471, %s468, 1
      %s473 = smul.addr %s470, 2
      %s474 = sadd.s32 %s472, %s473
      %s475 = smul.addr %s474, 8
      %s476 = scalar_lea.vmem %s1, %s475
      %s477 = smul.u32 2, %s27
      %s478 = smul.u32 2, %s27
      %p479 = scmp.lt.s32.totalorder %s26, 1
      %s480 = scalar_select %p479, %s26, 1
      %p481 = scmp.lt.s32.totalorder %s478, 1
      %s482 = scalar_select %p481, %s478, 1
      %s483 = smul.addr %s480, 8
      %s484 = sadd.s32 %s482, %s483
      %s485 = smul.addr %s484, 4
      %s486 = scalar_lea.vmem %s2, %s485
      %s487 = smul.u32 2, %s27
      %s488 = smul.u32 2, %s27
      %p489 = scmp.lt.s32.totalorder %s26, 1
      %s490 = scalar_select %p489, %s26, 1
      %p491 = scmp.lt.s32.totalorder %s488, 1
      %s492 = scalar_select %p491, %s488, 1
      %s493 = smul.addr %s490, 2
      %s494 = sadd.s32 %s492, %s493
      %s495 = smul.addr %s494, 8
      %s496 = scalar_lea.vmem %s11, %s495
      %s497 = smul.u32 2, %s27
      %v499 = vld [vmem:[%s476] sm:$0xff]
      %v500 = vld [vmem:[%s476 + $0x8] sm:$0xff]
      %v501 = vpack.c.bf16 %v499, %v499
      %v502 = vpack.c.bf16 %v500, %v500
      %v503 = vld [vmem:[%s486] sm:$0xf]
      %v504 = vld [vmem:[%s486 + $0x4] sm:$0xf]
      %v505 = vld [vmem:[%s486 + $0x8] sm:$0xf]
      %v506 = vld [vmem:[%s486 + $0xc] sm:$0xf]
      %v507 = vld [vmem:[%s486 + $0x10] sm:$0xf]
      %v508 = vld [vmem:[%s486 + $0x14] sm:$0xf]
      %v509 = vld [vmem:[%s486 + $0x18] sm:$0xf]
      %v510 = vld [vmem:[%s486 + $0x1c] sm:$0xf]
      %v511 = vunpack.c.l.bf16 %v501
      %v512 = vunpack.c.l.bf16 %v502
      %v513 = vunpack.c.l.bf16 %v503
      %v514 = vunpack.c.l.bf16 %v504
      %v515 = vunpack.c.l.bf16 %v505
      %v516 = vunpack.c.l.bf16 %v506
      %v517 = vunpack.c.l.bf16 %v507
      %v518 = vunpack.c.l.bf16 %v508
      %v519 = vunpack.c.l.bf16 %v509
      %v520 = vunpack.c.l.bf16 %v510
      %529 = vrot.lane.b32.xlu0 %v513, 112
      %v530 = vpop.permute.xlu0 %529
      %531 = vrot.lane.b32.xlu0 %v514, 112
      %v532 = vpop.permute.xlu0 %531
      %533 = vrot.lane.b32.xlu0 %v515, 112
      %v534 = vpop.permute.xlu0 %533
      %535 = vrot.lane.b32.xlu0 %v516, 112
      %v536 = vpop.permute.xlu0 %535
      %537 = vrot.lane.b32.xlu0 %v517, 112
      %v538 = vpop.permute.xlu0 %537
      %539 = vrot.lane.b32.xlu0 %v518, 112
      %v540 = vpop.permute.xlu0 %539
      %541 = vrot.lane.b32.xlu0 %v519, 112
      %v542 = vpop.permute.xlu0 %541
      %543 = vrot.lane.b32.xlu0 %v520, 112
      %v544 = vpop.permute.xlu0 %543
      %v553 = vsub.f32 %v511, %v530
      %v554 = vsub.f32 %v512, %v532
      %v555 = vsub.f32 %v511, %v534
      %v556 = vsub.f32 %v512, %v536
      %v557 = vsub.f32 %v511, %v538
      %v558 = vsub.f32 %v512, %v540
      %v559 = vsub.f32 %v511, %v542
      %v560 = vsub.f32 %v512, %v544
      %v561 = vpack.c.bf16 %v553, %v553
      %v562 = vpack.c.bf16 %v554, %v554
      %v563 = vpack.c.bf16 %v555, %v555
      %v564 = vpack.c.bf16 %v556, %v556
      %v565 = vpack.c.bf16 %v557, %v557
      %v566 = vpack.c.bf16 %v558, %v558
      %v567 = vpack.c.bf16 %v559, %v559
      %v568 = vpack.c.bf16 %v560, %v560
      %v569 = vunpack.c.l.bf16 %v561
      %v570 = vunpack.c.l.bf16 %v562
      %v571 = vunpack.c.l.bf16 %v563
      %v572 = vunpack.c.l.bf16 %v564
      %v573 = vunpack.c.l.bf16 %v565
      %v574 = vunpack.c.l.bf16 %v566
      %v575 = vunpack.c.l.bf16 %v567
      %v576 = vunpack.c.l.bf16 %v568
      %v577 = vmax.f32 %v569, 0.0
      %v578 = vmax.f32 %v570, 0.0
      %v579 = vmax.f32 %v571, 0.0
      %v580 = vmax.f32 %v572, 0.0
      %v581 = vmax.f32 %v573, 0.0
      %v582 = vmax.f32 %v574, 0.0
      %v583 = vmax.f32 %v575, 0.0
      %v584 = vmax.f32 %v576, 0.0
      %v585 = vpack.c.bf16 %v577, %v577
      %v586 = vpack.c.bf16 %v578, %v578
      %v587 = vpack.c.bf16 %v579, %v579
      %v588 = vpack.c.bf16 %v580, %v580
      %v589 = vpack.c.bf16 %v581, %v581
      %v590 = vpack.c.bf16 %v582, %v582
      %v591 = vpack.c.bf16 %v583, %v583
      %v592 = vpack.c.bf16 %v584, %v584
      %v593 = vld [vmem:[%s3] sm:$0xf]
      %v594 = vld [vmem:[%s3 + $0x4] sm:$0xf]
      %v595 = vld [vmem:[%s4] sm:$0x1]
      %v597 = vperm.slane %v595, 0
      %v607 = vunpack.c.l.b16 %v585
      %v608 = vunpack.c.l.b16 %v586
      %v609 = vunpack.c.l.b16 %v587
      %v610 = vunpack.c.l.b16 %v588
      %v611 = vunpack.c.l.b16 %v589
      %v612 = vunpack.c.l.b16 %v590
      %v613 = vunpack.c.l.b16 %v591
      %v614 = vunpack.c.l.b16 %v592
      %v615 = vpack.c.b16 %v608, %v607
      %v616 = vpack.c.b16 %v610, %v609
      %v617 = vpack.c.b16 %v612, %v611
      %v618 = vpack.c.b16 %v614, %v613
      %619 = vrot.lane.b32.xlu0 %v615, 112
      %v620 = vpop.permute.xlu0 %619
      %621 = vrot.lane.b32.xlu0 %v616, 112
      %v622 = vpop.permute.xlu0 %621
      %623 = vrot.lane.b32.xlu0 %v617, 112
      %v624 = vpop.permute.xlu0 %623
      %625 = vrot.lane.b32.xlu0 %v618, 112
      %v626 = vpop.permute.xlu0 %625
      %v629 = vunpack.c.l.b16 %v593
      %v630 = vunpack.c.l.b16 %v594
      %v631 = vpack.c.b16 %v630, %v629
      %vm633 = vcmask 130048
      %v635 = vsel %vm633, %v620, 0
      %v638 = vsel %vm633, %v622, 0
      %v641 = vsel %vm633, %v624, 0
      %v644 = vsel %vm633, %v626, 0
      %646 = vmatpush.bf16.msra.mxu0 0
      %647 = vmatpush.bf16.msra.mxu0 0
      %648 = vmatpush.bf16.msra.mxu0 0
      %649 = vmatpush.bf16.msra.mxu0 0
      %650 = vmatpush.bf16.msra.mxu0 0
      %651 = vmatpush.bf16.msra.mxu0 0
      %652 = vmatpush.bf16.msra.mxu0 0
      %653 = vmatpush.bf16.msra.mxu0 %v631
      %654 = vmatmul.bf16.gmra.mxu0 %v635
      %v655 = vpop.f32.mrf.mxu0
      %v656 = vadd.f32 %v597, %v655
      %v657 = vpop.f32.mrf.mxu0
      %v658 = vadd.f32 %v597, %v657
      %659 = vmatmul.bf16.gmra.mxu0 %v638
      %v660 = vpop.f32.mrf.mxu0
      %v661 = vadd.f32 %v597, %v660
      %v662 = vpop.f32.mrf.mxu0
      %v663 = vadd.f32 %v597, %v662
      %664 = vmatmul.bf16.gmra.mxu0 %v641
      %v665 = vpop.f32.mrf.mxu0
      %v666 = vadd.f32 %v597, %v665
      %v667 = vpop.f32.mrf.mxu0
      %v668 = vadd.f32 %v597, %v667
      %669 = vmatmul.bf16.gmra.mxu0 %v644
      %v670 = vpop.f32.mrf.mxu0
      %v671 = vadd.f32 %v597, %v670
      %v672 = vpop.f32.mrf.mxu0
      %v673 = vadd.f32 %v597, %v672
      %674 = vdwg.mxu0
      %v675 = vsub.f32 %v511, %v513
      %v676 = vsub.f32 %v512, %v514
      %v677 = vsub.f32 %v511, %v515
      %v678 = vsub.f32 %v512, %v516
      %v679 = vsub.f32 %v511, %v517
      %v680 = vsub.f32 %v512, %v518
      %v681 = vsub.f32 %v511, %v519
      %v682 = vsub.f32 %v512, %v520
      %v683 = vpack.c.bf16 %v675, %v675
      %v684 = vpack.c.bf16 %v676, %v676
      %v685 = vpack.c.bf16 %v677, %v677
      %v686 = vpack.c.bf16 %v678, %v678
      %v687 = vpack.c.bf16 %v679, %v679
      %v688 = vpack.c.bf16 %v680, %v680
      %v689 = vpack.c.bf16 %v681, %v681
      %v690 = vpack.c.bf16 %v682, %v682
      %v691 = vpack.c.bf16 %v656, %v656
      %v692 = vpack.c.bf16 %v658, %v658
      %v693 = vpack.c.bf16 %v661, %v661
      %v694 = vpack.c.bf16 %v663, %v663
      %v695 = vpack.c.bf16 %v666, %v666
      %v696 = vpack.c.bf16 %v668, %v668
      %v697 = vpack.c.bf16 %v671, %v671
      %v698 = vpack.c.bf16 %v673, %v673
      %v699 = vunpack.c.l.bf16 %v683
      %v700 = vunpack.c.l.bf16 %v684
      %v701 = vunpack.c.l.bf16 %v685
      %v702 = vunpack.c.l.bf16 %v686
      %v703 = vunpack.c.l.bf16 %v687
      %v704 = vunpack.c.l.bf16 %v688
      %v705 = vunpack.c.l.bf16 %v689
      %v706 = vunpack.c.l.bf16 %v690
      %v707 = vunpack.c.l.bf16 %v691
      %v708 = vunpack.c.l.bf16 %v692
      %v709 = vunpack.c.l.bf16 %v693
      %v710 = vunpack.c.l.bf16 %v694
      %v711 = vunpack.c.l.bf16 %v695
      %v712 = vunpack.c.l.bf16 %v696
      %v713 = vunpack.c.l.bf16 %v697
      %v714 = vunpack.c.l.bf16 %v698
      %v715 = vadd.f32 %v699, %v707
      %v716 = vadd.f32 %v700, %v708
      %v717 = vadd.f32 %v701, %v709
      %v718 = vadd.f32 %v702, %v710
      %v719 = vadd.f32 %v703, %v711
      %v720 = vadd.f32 %v704, %v712
      %v721 = vadd.f32 %v705, %v713
      %v722 = vadd.f32 %v706, %v714
      %v723 = vpack.c.bf16 %v716, %v715
      %v724 = vpack.c.bf16 %v718, %v717
      %v725 = vpack.c.bf16 %v720, %v719
      %v726 = vpack.c.bf16 %v722, %v721
      %v727 = vld [vmem:[%s5] sm:$0xf]
      %v728 = vld [vmem:[%s5 + $0x4] sm:$0xf]
      %v729 = vld [vmem:[%s6] sm:$0x1]
      %v731 = vperm.slane %v729, 0
      %v735 = vunpack.c.l.b16 %v727
      %v736 = vunpack.c.l.b16 %v728
      %v737 = vpack.c.b16 %v736, %v735
      %v740 = vsel %vm633, %v723, 0
      %v743 = vsel %vm633, %v724, 0
      %v746 = vsel %vm633, %v725, 0
      %v749 = vsel %vm633, %v726, 0
      %751 = vmatpush.bf16.msra.mxu0 0
      %752 = vmatpush.bf16.msra.mxu0 0
      %753 = vmatpush.bf16.msra.mxu0 0
      %754 = vmatpush.bf16.msra.mxu0 0
      %755 = vmatpush.bf16.msra.mxu0 0
      %756 = vmatpush.bf16.msra.mxu0 0
      %757 = vmatpush.bf16.msra.mxu0 0
      %758 = vmatpush.bf16.msra.mxu0 %v737
      %759 = vmatmul.bf16.gmra.mxu0 %v740
      %v760 = vpop.f32.mrf.mxu0
      %v761 = vadd.f32 %v731, %v760
      %v762 = vpop.f32.mrf.mxu0
      %v763 = vadd.f32 %v731, %v762
      %764 = vmatmul.bf16.gmra.mxu0 %v743
      %v765 = vpop.f32.mrf.mxu0
      %v766 = vadd.f32 %v731, %v765
      %v767 = vpop.f32.mrf.mxu0
      %v768 = vadd.f32 %v731, %v767
      %769 = vmatmul.bf16.gmra.mxu0 %v746
      %v770 = vpop.f32.mrf.mxu0
      %v771 = vadd.f32 %v731, %v770
      %v772 = vpop.f32.mrf.mxu0
      %v773 = vadd.f32 %v731, %v772
      %774 = vmatmul.bf16.gmra.mxu0 %v749
      %v775 = vpop.f32.mrf.mxu0
      %v776 = vadd.f32 %v731, %v775
      %v777 = vpop.f32.mrf.mxu0
      %v778 = vadd.f32 %v731, %v777
      %779 = vdwg.mxu0
      %v780 = vmax.f32 %v761, 0.0
      %v781 = vmax.f32 %v763, 0.0
      %v782 = vmax.f32 %v766, 0.0
      %v783 = vmax.f32 %v768, 0.0
      %v784 = vmax.f32 %v771, 0.0
      %v785 = vmax.f32 %v773, 0.0
      %v786 = vmax.f32 %v776, 0.0
      %v787 = vmax.f32 %v778, 0.0
      %v788 = vpack.c.bf16 %v781, %v780
      %v789 = vpack.c.bf16 %v783, %v782
      %v790 = vpack.c.bf16 %v785, %v784
      %v791 = vpack.c.bf16 %v787, %v786
      %v792 = vld [vmem:[%s7] sm:$0xf]
      %v793 = vld [vmem:[%s7 + $0x4] sm:$0xf]
      %v794 = vld [vmem:[%s8] sm:$0x1]
      %v796 = vperm.slane %v794, 0
      %v800 = vunpack.c.l.b16 %v792
      %v801 = vunpack.c.l.b16 %v793
      %v802 = vpack.c.b16 %v801, %v800
      %v805 = vsel %vm633, %v788, 0
      %v808 = vsel %vm633, %v789, 0
      %v811 = vsel %vm633, %v790, 0
      %v814 = vsel %vm633, %v791, 0
      %816 = vmatpush.bf16.msra.mxu0 0
      %817 = vmatpush.bf16.msra.mxu0 0
      %818 = vmatpush.bf16.msra.mxu0 0
      %819 = vmatpush.bf16.msra.mxu0 0
      %820 = vmatpush.bf16.msra.mxu0 0
      %821 = vmatpush.bf16.msra.mxu0 0
      %822 = vmatpush.bf16.msra.mxu0 0
      %823 = vmatpush.bf16.msra.mxu0 %v802
      %824 = vmatmul.bf16.gmra.mxu0 %v805
      %v825 = vpop.f32.mrf.mxu0
      %v826 = vadd.f32 %v796, %v825
      %v827 = vpop.f32.mrf.mxu0
      %v828 = vadd.f32 %v796, %v827
      %829 = vmatmul.bf16.gmra.mxu0 %v808
      %v830 = vpop.f32.mrf.mxu0
      %v831 = vadd.f32 %v796, %v830
      %v832 = vpop.f32.mrf.mxu0
      %v833 = vadd.f32 %v796, %v832
      %834 = vmatmul.bf16.gmra.mxu0 %v811
      %v835 = vpop.f32.mrf.mxu0
      %v836 = vadd.f32 %v796, %v835
      %v837 = vpop.f32.mrf.mxu0
      %v838 = vadd.f32 %v796, %v837
      %839 = vmatmul.bf16.gmra.mxu0 %v814
      %v840 = vpop.f32.mrf.mxu0
      %v841 = vadd.f32 %v796, %v840
      %v842 = vpop.f32.mrf.mxu0
      %v843 = vadd.f32 %v796, %v842
      %844 = vdwg.mxu0
      %853 = vrot.lane.b32.xlu0 %v656, 16
      %v854 = vpop.permute.xlu0 %853
      %855 = vrot.lane.b32.xlu0 %v658, 16
      %v856 = vpop.permute.xlu0 %855
      %857 = vrot.lane.b32.xlu0 %v661, 16
      %v858 = vpop.permute.xlu0 %857
      %859 = vrot.lane.b32.xlu0 %v663, 16
      %v860 = vpop.permute.xlu0 %859
      %861 = vrot.lane.b32.xlu0 %v666, 16
      %v862 = vpop.permute.xlu0 %861
      %863 = vrot.lane.b32.xlu0 %v668, 16
      %v864 = vpop.permute.xlu0 %863
      %865 = vrot.lane.b32.xlu0 %v671, 16
      %v866 = vpop.permute.xlu0 %865
      %867 = vrot.lane.b32.xlu0 %v673, 16
      %v868 = vpop.permute.xlu0 %867
      %v877 = vadd.f32 %v513, %v854
      %v878 = vadd.f32 %v514, %v856
      %v879 = vadd.f32 %v515, %v858
      %v880 = vadd.f32 %v516, %v860
      %v881 = vadd.f32 %v517, %v862
      %v882 = vadd.f32 %v518, %v864
      %v883 = vadd.f32 %v519, %v866
      %v884 = vadd.f32 %v520, %v868
      %v885 = vsel %vm633, %v826, -inf
      %v886 = vsel %vm633, %v831, -inf
      %v887 = vsel %vm633, %v836, -inf
      %v888 = vmax.f32 %v885, %v887
      %v889 = vsel %vm633, %v841, -inf
      %v890 = vmax.f32 %v886, %v889
      %v891 = vmax.f32 %v888, %v890
      %v892 = vsel %vm633, %v828, -inf
      %v893 = vsel %vm633, %v833, -inf
      %v894 = vsel %vm633, %v838, -inf
      %v895 = vmax.f32 %v892, %v894
      %v896 = vsel %vm633, %v843, -inf
      %v897 = vmax.f32 %v893, %v896
      %v898 = vmax.f32 %v895, %v897
      %v899 = vsub.f32 %v826, %v891
      %v900 = vsub.f32 %v828, %v898
      %v901 = vsub.f32 %v831, %v891
      %v902 = vsub.f32 %v833, %v898
      %v903 = vsub.f32 %v836, %v891
      %v904 = vsub.f32 %v838, %v898
      %v905 = vsub.f32 %v841, %v891
      %v906 = vsub.f32 %v843, %v898
      %v907 = vmul.f32 %v899, 1.442695
      %v908 = vpow.pop %v907
      %v909 = vmul.f32 %v900, 1.442695
      %v910 = vpow.pop %v909
      %v911 = vmul.f32 %v901, 1.442695
      %v912 = vpow.pop %v911
      %v913 = vmul.f32 %v902, 1.442695
      %v914 = vpow.pop %v913
      %v915 = vmul.f32 %v903, 1.442695
      %v916 = vpow.pop %v915
      %v917 = vmul.f32 %v904, 1.442695
      %v918 = vpow.pop %v917
      %v919 = vmul.f32 %v905, 1.442695
      %v920 = vpow.pop %v919
      %v921 = vmul.f32 %v906, 1.442695
      %v922 = vpow.pop %v921
      %931 = vrot.lane.b32.xlu0 %v877, 112
      %v932 = vpop.permute.xlu0 %931
      %933 = vrot.lane.b32.xlu0 %v878, 112
      %v934 = vpop.permute.xlu0 %933
      %935 = vrot.lane.b32.xlu0 %v879, 112
      %v936 = vpop.permute.xlu0 %935
      %937 = vrot.lane.b32.xlu0 %v880, 112
      %v938 = vpop.permute.xlu0 %937
      %939 = vrot.lane.b32.xlu0 %v881, 112
      %v940 = vpop.permute.xlu0 %939
      %941 = vrot.lane.b32.xlu0 %v882, 112
      %v942 = vpop.permute.xlu0 %941
      %943 = vrot.lane.b32.xlu0 %v883, 112
      %v944 = vpop.permute.xlu0 %943
      %945 = vrot.lane.b32.xlu0 %v884, 112
      %v946 = vpop.permute.xlu0 %945
      %v955 = vmul.f32 %v908, %v932
      %v956 = vmul.f32 %v910, %v934
      %v957 = vmul.f32 %v912, %v936
      %v958 = vmul.f32 %v914, %v938
      %v959 = vmul.f32 %v916, %v940
      %v960 = vmul.f32 %v918, %v942
      %v961 = vmul.f32 %v920, %v944
      %v962 = vmul.f32 %v922, %v946
      %v963 = vsel %vm633, %v955, 0.0
      %v964 = vsel %vm633, %v957, 0.0
      %v965 = vadd.f32 %v963, %v964
      %v966 = vsel %vm633, %v959, 0.0
      %v967 = vadd.f32 %v965, %v966
      %v968 = vsel %vm633, %v961, 0.0
      %v969 = vadd.f32 %v967, %v968
      %v970 = vsel %vm633, %v956, 0.0
      %v971 = vsel %vm633, %v958, 0.0
      %v972 = vadd.f32 %v970, %v971
      %v973 = vsel %vm633, %v960, 0.0
      %v974 = vadd.f32 %v972, %v973
      %v975 = vsel %vm633, %v962, 0.0
      %v976 = vadd.f32 %v974, %v975
      %v977 = vsel %vm633, %v908, 0.0
      %v978 = vsel %vm633, %v912, 0.0
      %v979 = vadd.f32 %v977, %v978
      %v980 = vsel %vm633, %v916, 0.0
      %v981 = vadd.f32 %v979, %v980
      %v982 = vsel %vm633, %v920, 0.0
      %v983 = vadd.f32 %v981, %v982
      %v984 = vsel %vm633, %v910, 0.0
      %v985 = vsel %vm633, %v914, 0.0
      %v986 = vadd.f32 %v984, %v985
      %v987 = vsel %vm633, %v918, 0.0
      %v988 = vadd.f32 %v986, %v987
      %v989 = vsel %vm633, %v922, 0.0
      %v990 = vadd.f32 %v988, %v989
      %v991 = vrcp.pop %v983
      %v992 = vrcp.pop %v990
      %v993 = vmul.f32 %v969, %v991
      %v994 = vmul.f32 %v976, %v992
      %v995 = vpack.c.bf16 %v994, %v993
      %v996 = vld [vmem:[%s9] sm:$0xf]
      %v997 = vld [vmem:[%s9 + $0x4] sm:$0xf]
      %v998 = vld [vmem:[%s10] sm:$0x1]
      %v1000 = vperm.slane %v998, 0
      %v1004 = vunpack.c.l.b16 %v996
      %v1005 = vunpack.c.l.b16 %v997
      %v1006 = vpack.c.b16 %v1005, %v1004
      %v1009 = vsel %vm633, %v995, 0
      %1011 = vmatpush.bf16.msra.mxu0 0
      %1012 = vmatpush.bf16.msra.mxu0 0
      %1013 = vmatpush.bf16.msra.mxu0 0
      %1014 = vmatpush.bf16.msra.mxu0 0
      %1015 = vmatpush.bf16.msra.mxu0 0
      %1016 = vmatpush.bf16.msra.mxu0 0
      %1017 = vmatpush.bf16.msra.mxu0 0
      %1018 = vmatpush.bf16.msra.mxu0 %v1006
      %1019 = vmatmul.bf16.gmra.mxu0 %v1009
      %v1020 = vpop.f32.mrf.mxu0
      %v1021 = vadd.f32 %v1000, %v1020
      %v1022 = vpop.f32.mrf.mxu0
      %v1023 = vadd.f32 %v1000, %v1022
      %1024 = vdwg.mxu0
      %v1025 = vld [vmem:[%s466] sm:$0xff]
      %v1026 = vld [vmem:[%s466 + $0x8] sm:$0xff]
      %v1027 = vadd.f32 %v1021, %v1025
      %v1028 = vadd.f32 %v1023, %v1026
      %1029 = vst.msk [vmem:[%s496] sm:$0xff] %vm633, %v1027
      %1030 = vst.msk [vmem:[%s496 + $0x8] sm:$0xff] %vm633, %v1028
      %s1031 = smul.u32 2, %s27
      %p1032 = scmp.lt.s32.totalorder %s26, 1
      %s1033 = scalar_select %p1032, %s26, 1
      %p1034 = scmp.lt.s32.totalorder %s1031, 1
      %s1035 = scalar_select %p1034, %s1031, 1
      %s1036 = smul.addr %s1033, 2
      %s1037 = sadd.s32 %s1035, %s1036
      %s1038 = smul.addr %s1037, 8
      %s1039 = scalar_lea.vmem %s11, %s1038
      // Predicated region
      $region65: #{tdpt_forward.5} parent=63 // pred_check
        %p1040 = pneg %p306
      $region66: #{tdpt_forward.5} parent=63 // pred_check_branch
        %1042 = sbr.rel (%p1040) target = $region68
      $region67: #{tdpt_forward.5} parent=63 // pred_region
        %s1043 = smul.u32 2, %s27
      $region68: #{tdpt_forward.5} parent=63 // pred_fallthru
        _
    $region64: #{tdpt_forward.5} parent=5 // pred_fallthru
      _
    %p1044 = scmp.le.s32.totalorder 2, %s17
    // Predicated region
    $region69: #{tdpt_forward.5} parent=5 // pred_check
      %p1045 = pneg %p1044
    $region70: #{tdpt_forward.5} parent=5 // pred_check_branch
      %1047 = sbr.rel (%p1045) target = $region72
    $region71: #{tdpt_forward.5} parent=5 // pred_region
      %s1048 = ssub.s32 %s17, 2
      // Predicated region
      $region73: #{tdpt_forward.5} parent=71 // pred_check
        %p1049 = pneg %p312
      $region74: #{tdpt_forward.5} parent=71 // pred_check_branch
        %1051 = sbr.rel (%p1049) target = $region76
      $region75: #{tdpt_forward.5} parent=71 // pred_region
        %s1052 = smul.u32 2, %s29
        %p1053 = scmp.lt.s32.totalorder %s28, 1
        %s1054 = scalar_select %p1053, %s28, 1
        %p1055 = scmp.lt.s32.totalorder %s1052, 1
        %s1056 = scalar_select %p1055, %s1052, 1
        %s1057 = smul.addr %s1054, 2
        %s1058 = sadd.s32 %s1056, %s1057
        %s1059 = smul.addr %s1058, 8
        %s1060 = scalar_lea.vmem %s11, %s1059
      $region76: #{tdpt_forward.5} parent=71 // pred_fallthru
        _
    $region72: #{tdpt_forward.5} parent=5 // pred_fallthru
      _
  $region6: #{tdpt_forward.5} parent=0 // loop_footer
    %s21 = sadd.s32 1, %s17
  $region7: #{tdpt_forward.5} parent=0 // loop_footer_branch
    %16 = sbr.rel target = $region3
  $region8: #{tdpt_forward.5} parent=0 // loop_exit
    _

</llo_original>
